<compile_context>
chip_gen: v5e
topology: v5e:2x2
jax: 0.10.0
libtpu: 0.0.40
codegen_flags: <defaults>
</compile_context>

<pallas_src>
import functools

import jax
import jax.numpy as jnp
from jax import lax
from jax.experimental import pallas as pl
from jax.experimental.pallas import tpu as pltpu

LANE = 128
SUBLANE = 8


def _round_up(x, m):
    return (x + m - 1) // m * m


def _tpu_vmem_capacity():
    """Physical per-core VMEM in bytes, or None if it cannot be queried."""
    try:
        return int(pltpu.get_tpu_info().vmem_capacity_bytes)
    except Exception:
        return None


def _derive_vmem_limit(vmem_cap_bytes):
    if vmem_cap_bytes is None:
        return None                      # keep the compiler's default scoped limit
    headroom = 16 * 1024 * 1024
    return int(max(16 * 1024 * 1024,
                   min(vmem_cap_bytes - headroom, 112 * 1024 * 1024)))


def _derive_seq_tile(S, B_pad, H, emb_itemsize, vmem_cap_bytes):
    """Chip-aware sequence tile: small on v7x (64 MiB VMEM), larger on v5e/v6e
    (128 MiB), clamped so the Ts-scaling VMEM (fused f32 gate scratch + the
    double-buffered emb block) stays within ~1/4 of the physical budget."""
    per_step = B_pad * (4 * H * 4 + 2 * H * emb_itemsize)
    budget = max(vmem_cap_bytes // 4, 2 * 1024 * 1024)
    cap = 64 if vmem_cap_bytes <= 64 * 1024 * 1024 else 256
    ts = min(cap, max(SUBLANE, budget // max(per_step, 1)))
    return int(max(1, min(S, ts)))


def lstm_lm_kernel(S_true, Ts, B_pad, H, n_tiles,
                   emb_ref, wih_ref, whh_ref, b_ref,
                   num_ref, wtext_ref, btext_ref, wnum_ref, bnum_ref,
                   wpt_ref, wpn_ref, bproj_ref,
                   out_ref,
                   h_sc, c_sc, maxh_sc, xg_sc):
    tile = pl.program_id(0)

    # ---- init persistent recurrent state on the first sequence tile --------
    @pl.when(tile == 0)
    def _():
        h_sc[...] = jnp.zeros_like(h_sc)
        c_sc[...] = jnp.zeros_like(c_sc)
        maxh_sc[...] = jnp.full_like(maxh_sc, -jnp.inf)

    # ---- hoisted, fused input projection: ONE tall matmul, bias folded -----
    # (Ts*B_pad, H) @ (H, 4H) -> f32 scratch, read per-step in the recurrence.
    xg_sc[...] = (jnp.dot(emb_ref[...], wih_ref[...],
                          preferred_element_type=jnp.float32)
                  + b_ref[...])                            # (Ts*B_pad, 4H)

    # hoist loop-invariant recurrent weight out of the time loop
    whh = whh_ref[...]                                     # (H, 4H)
    cdt = whh.dtype                                        # bf16 or f32

    def step(t, carry):
        h, c, maxh = carry
        row = pl.multiple_of(t * B_pad, SUBLANE)
        # single fused recurrent matmul per step (gate order: i, f, g, o)
        gates = xg_sc[pl.ds(row, B_pad), :] + jnp.dot(
            h.astype(cdt), whh, preferred_element_type=jnp.float32)
        i_g = jax.nn.sigmoid(gates[:, 0 * H:1 * H])
        f_g = jax.nn.sigmoid(gates[:, 1 * H:2 * H])
        g_c = jnp.tanh(gates[:, 2 * H:3 * H])
        o_g = jax.nn.sigmoid(gates[:, 3 * H:4 * H])
        c_new = f_g * c + i_g * g_c
        h_new = o_g * jnp.tanh(c_new)
        return h_new, c_new, jnp.maximum(maxh, h_new)

    def run_steps(n_steps):
        # unroll tuned to keep carried h/c/max + gate temporaries inside the
        # 64-vreg file at larger H
        unroll = n_steps if n_steps <= 16 else (8 if H <= 256 else 4)
        h, c, maxh = lax.fori_loop(0, n_steps, step,
                                   (h_sc[...], c_sc[...], maxh_sc[...]),
                                   unroll=unroll)
        h_sc[...] = h
        c_sc[...] = c
        maxh_sc[...] = maxh

    # ---- recurrence: no masked/wasted steps on the ragged last tile --------
    rem = S_true - (n_tiles - 1) * Ts                      # static python int
    if rem == Ts:
        run_steps(Ts)
    else:
        @pl.when(tile < n_tiles - 1)
        def _():
            run_steps(Ts)

        @pl.when(tile == n_tiles - 1)
        def _():
            run_steps(rem)

    # ---- epilogue: Linear/Tanh head, only on the last sequence tile --------
    @pl.when(tile == n_tiles - 1)
    def _():
        maxh = maxh_sc[...]
        wdt = wtext_ref.dtype
        text = (jnp.dot(jnp.tanh(maxh).astype(wdt), wtext_ref[...],
                        preferred_element_type=jnp.float32)
                + btext_ref[...])                          # (B_pad, H)
        numf = jnp.tanh(jnp.dot(num_ref[...], wnum_ref[...],
                                preferred_element_type=jnp.float32)
                        + bnum_ref[...])                   # (B_pad, H)
        # tanh(cat(a,b)) @ W == tanh(a) @ W_top + tanh(b) @ W_bot
        logits = (jnp.dot(jnp.tanh(text).astype(wdt), wpt_ref[...],
                          preferred_element_type=jnp.float32)
                  + jnp.dot(jnp.tanh(numf).astype(wdt), wpn_ref[...],
                            preferred_element_type=jnp.float32)
                  + bproj_ref[...])                        # (B_pad, C_pad)
        out_ref[...] = logits.astype(out_ref.dtype)


def _resident(shape):
    n = len(shape)
    return pl.BlockSpec(shape, lambda t, n=n: (0,) * n)


def full_word_lm_forward(params, input_ids, duration, sum_value,
                         *, num_classes, seq_tile=None):
    emb_tab = params['embedding']
    H = emb_tab.shape[1]
    B, S = input_ids.shape
    C_pad = params['b_proj'].shape[-1]

    B_pad = _round_up(max(B, SUBLANE), SUBLANE)

    vmem_cap = _tpu_vmem_capacity()
    cap_for_ts = vmem_cap if vmem_cap is not None else 128 * 1024 * 1024
    if seq_tile is not None:
        Ts = int(max(1, min(S, seq_tile)))
    else:
        Ts = _derive_seq_tile(S, B_pad, H, emb_tab.dtype.itemsize, cap_for_ts)
    S_pad = _round_up(S, Ts)
    n_tiles = S_pad // Ts
    vmem_limit = _derive_vmem_limit(vmem_cap)

    # Time-major embedding gather with batch/seq padding fused into the gather
    # (no separate transpose / pad copy of the big activation tensor).  Padded
    # batch rows use token id 0; their state is garbage but sliced off below.
    ids = jnp.zeros((S_pad, B_pad), jnp.int32)
    ids = ids.at[:S, :B].set(jnp.transpose(input_ids).astype(jnp.int32))
    emb = emb_tab[ids].reshape(S_pad * B_pad, H)           # (S_pad*B_pad, H)

    numeric = jnp.zeros((B_pad, 2), jnp.float32)
    numeric = numeric.at[:B, 0].set(duration.astype(jnp.float32))
    numeric = numeric.at[:B, 1].set(sum_value.astype(jnp.float32))

    kernel = functools.partial(lstm_lm_kernel, S, Ts, B_pad, H, n_tiles)

    cp_kwargs = dict(dimension_semantics=("arbitrary",))
    if vmem_limit is not None:
        cp_kwargs["vmem_limit_bytes"] = vmem_limit

    out = pl.pallas_call(
        kernel,
        out_shape=jax.ShapeDtypeStruct((B_pad, C_pad), jnp.float32),
        grid=(n_tiles,),
        in_specs=[
            pl.BlockSpec((Ts * B_pad, H), lambda t: (t, 0)),   # emb: tiled over seq
            _resident(params['w_ih_f'].shape),                 # (H, 4H)
            _resident(params['w_hh_f'].shape),                 # (H, 4H)
            _resident(params['b_lstm'].shape),                 # (1, 4H)
            _resident((B_pad, 2)),
            _resident(params['w_text_t'].shape),
            _resident(params['b_text'].shape),
            _resident(params['w_num_t'].shape),
            _resident(params['b_num'].shape),
            _resident(params['w_proj_text_t'].shape),
            _resident(params['w_proj_num_t'].shape),
            _resident(params['b_proj'].shape),
        ],
        out_specs=pl.BlockSpec((B_pad, C_pad), lambda t: (0, 0)),
        scratch_shapes=[
            pltpu.VMEM((B_pad, H), jnp.float32),               # h
            pltpu.VMEM((B_pad, H), jnp.float32),               # c
            pltpu.VMEM((B_pad, H), jnp.float32),               # running max
            pltpu.VMEM((Ts * B_pad, 4 * H), jnp.float32),      # fused x-gates
        ],
        compiler_params=pltpu.CompilerParams(**cp_kwargs),
    )(emb,
      params['w_ih_f'], params['w_hh_f'], params['b_lstm'],
      numeric,
      params['w_text_t'], params['b_text'],
      params['w_num_t'], params['b_num'],
      params['w_proj_text_t'], params['w_proj_num_t'], params['b_proj'])

    return out[:B, :num_classes]


# ----------------------------- parameters ----------------------------------
def init_raw_params(key, vocab_size, hidden_dim, num_classes):
    """PyTorch-layout parameters (Linear/LSTM weights stored as (out, in))."""
    H, C = hidden_dim, num_classes
    ks = jax.random.split(key, 11)
    u = lambda kk, shape, lim: jax.random.uniform(kk, shape, jnp.float32, -lim, lim)
    kl = 1.0 / jnp.sqrt(H)
    return {
        'embedding': jax.random.normal(ks[0], (vocab_size, H), jnp.float32),
        'w_ih': u(ks[1], (4 * H, H), kl),               # LSTM weight_ih_l0 (i,f,g,o)
        'w_hh': u(ks[2], (4 * H, H), kl),               # LSTM weight_hh_l0
        'b_ih': u(ks[3], (4 * H,), kl),
        'b_hh': u(ks[4], (4 * H,), kl),
        'w_text': u(ks[5], (H, H), 1.0 / jnp.sqrt(H)),
        'b_text': u(ks[6], (H,), 1.0 / jnp.sqrt(H)),
        'w_num': u(ks[7], (H, 2), 1.0 / jnp.sqrt(2.0)),
        'b_num': u(ks[8], (H,), 1.0 / jnp.sqrt(2.0)),
        'w_proj': u(ks[9], (C, 2 * H), 1.0 / jnp.sqrt(2 * H)),
        'b_proj': u(ks[10], (C,), 1.0 / jnp.sqrt(2 * H)),
    }


def prepare_params(raw, compute_dtype=jnp.float32):
    """Kernel layout: gate-fused (H, 4H) LSTM weights, transposed linears,
    class dim zero-padded to a full 128-lane block.  `compute_dtype=bfloat16`
    casts the HBM/VMEM-heavy tensors (embedding table, LSTM/head weights) for
    the bf16 MXU path; biases, the tiny numeric linear, and all accumulation
    stay f32."""
    H = raw['w_text'].shape[0]
    C = raw['b_proj'].shape[0]
    C_pad = _round_up(max(C, LANE), LANE)
    cdt = compute_dtype

    w_proj_t = raw['w_proj'].T                                  # (2H, C)
    pad = ((0, 0), (0, C_pad - C))
    return {
        'embedding': raw['embedding'].astype(cdt),
        'w_ih_f': raw['w_ih'].T.astype(cdt),                    # (H, 4H), gates i,f,g,o
        'w_hh_f': raw['w_hh'].T.astype(cdt),                    # (H, 4H)
        'b_lstm': (raw['b_ih'] + raw['b_hh']).reshape(1, 4 * H),
        'w_text_t': raw['w_text'].T.astype(cdt),
        'b_text': raw['b_text'].reshape(1, H),
        'w_num_t': raw['w_num'].T,                              # (2, H), kept f32
        'b_num': raw['b_num'].reshape(1, H),
        'w_proj_text_t': jnp.pad(w_proj_t[:H], pad).astype(cdt),  # (H, C_pad)
        'w_proj_num_t': jnp.pad(w_proj_t[H:], pad).astype(cdt),   # (H, C_pad)
        'b_proj': jnp.pad(raw['b_proj'], (0, C_pad - C)).reshape(1, C_pad),
    }


# ----------------------------- reference ------------------------------------
def ref_forward(raw, input_ids, duration, sum_value):
    """Pure-JAX reference matching the PyTorch forward (eval mode)."""
    emb = raw['embedding'][input_ids]                           # (B, S, H)
    B, S, H = emb.shape
    w_ih_t, w_hh_t = raw['w_ih'].T, raw['w_hh'].T
    b = raw['b_ih'] + raw['b_hh']

    def step(carry, x_t):
        h, c = carry
        gates = x_t @ w_ih_t + h @ w_hh_t + b
        i = jax.nn.sigmoid(gates[:, :H])
        f = jax.nn.sigmoid(gates[:, H:2 * H])
        g = jnp.tanh(gates[:, 2 * H:3 * H])
        o = jax.nn.sigmoid(gates[:, 3 * H:])
        c = f * c + i * g
        h = o * jnp.tanh(c)
        return (h, c), h

    init = (jnp.zeros((B, H), jnp.float32), jnp.zeros((B, H), jnp.float32))
    _, hs = lax.scan(step, init, jnp.transpose(emb, (1, 0, 2)))
    agg = hs.max(axis=0)
    text = jnp.tanh(agg) @ raw['w_text'].T + raw['b_text']
    numeric = jnp.stack([duration, sum_value], axis=1)
    numf = jnp.tanh(numeric @ raw['w_num'].T + raw['b_num'])
    comb = jnp.concatenate([text, numf], axis=1)
    return jnp.tanh(comb) @ raw['w_proj'].T + raw['b_proj']


if __name__ == "__main__":
    VOCAB, HIDDEN, NUM_CLASSES = 64, 32, 4
    B, S = 2, 8

    key = jax.random.PRNGKey(0)
    kp, kids, kdur, ksum = jax.random.split(key, 4)
    raw = init_raw_params(kp, VOCAB, HIDDEN, NUM_CLASSES)

    input_ids = jax.random.randint(kids, (B, S), 0, VOCAB, dtype=jnp.int32)
    duration = jax.random.normal(kdur, (B,), jnp.float32)
    sum_value = jax.random.normal(ksum, (B,), jnp.float32)

    ref = ref_forward(raw, input_ids, duration, sum_value)

    fwd = jax.jit(full_word_lm_forward,
                  static_argnames=("num_classes", "seq_tile"))

    # f32 path: numerically matches the PyTorch/JAX reference.
    params_f32 = prepare_params(raw, compute_dtype=jnp.float32)
    out = jax.block_until_ready(
        fwd(params_f32, input_ids, duration, sum_value, num_classes=NUM_CLASSES))
    assert out.shape == (B, NUM_CLASSES)
    assert jnp.allclose(out, ref, atol=2e-4, rtol=2e-4), (out, ref)

    # bf16 weight path (v6e/v7x MXU rate + VMEM/HBM diet); loose tolerance
    # accounts for bf16 weight quantization, accumulation stays f32.
    params_bf16 = prepare_params(raw, compute_dtype=jnp.bfloat16)
    out_bf16 = jax.block_until_ready(
        fwd(params_bf16, input_ids, duration, sum_value, num_classes=NUM_CLASSES))
    assert out_bf16.shape == (B, NUM_CLASSES)
    assert jnp.allclose(out_bf16, ref, atol=1e-1, rtol=1e-1), (out_bf16, ref)

    print("KERNEL_OK")
</pallas_src>

<mosaic_0001>
module attributes {stable_mosaic.version = 11 : i64} {
  func.func @lstm_lm_kernel(%arg0: i32, %arg1: memref<64x32xf32, #tpu.memory_space<vmem>>, %arg2: memref<32x128xf32, #tpu.memory_space<vmem>>, %arg3: memref<32x128xf32, #tpu.memory_space<vmem>>, %arg4: memref<1x128xf32, #tpu.memory_space<vmem>>, %arg5: memref<8x2xf32, #tpu.memory_space<vmem>>, %arg6: memref<32x32xf32, #tpu.memory_space<vmem>>, %arg7: memref<1x32xf32, #tpu.memory_space<vmem>>, %arg8: memref<2x32xf32, #tpu.memory_space<vmem>>, %arg9: memref<1x32xf32, #tpu.memory_space<vmem>>, %arg10: memref<32x128xf32, #tpu.memory_space<vmem>>, %arg11: memref<32x128xf32, #tpu.memory_space<vmem>>, %arg12: memref<1x128xf32, #tpu.memory_space<vmem>>, %arg13: memref<8x128xf32, #tpu.memory_space<vmem>>, %arg14: memref<8x32xf32, #tpu.memory_space<vmem>>, %arg15: memref<8x32xf32, #tpu.memory_space<vmem>>, %arg16: memref<8x32xf32, #tpu.memory_space<vmem>>, %arg17: memref<64x128xf32, #tpu.memory_space<vmem>>) attributes {dimension_semantics = [#tpu.dimension_semantics<arbitrary>], iteration_bounds = array<i64: 1>, scalar_prefetch = 0 : i64, scratch_operands = 4 : i64, tpu.core_type = #tpu.core_type<tc>, window_params = [{transform_indices = @transform_0, window_bounds = array<i64: 64, 32>}, {pipeline_mode = #tpu.pipeline_mode<synchronous>, transform_indices = @transform_1, window_bounds = array<i64: 32, 128>}, {pipeline_mode = #tpu.pipeline_mode<synchronous>, transform_indices = @transform_2, window_bounds = array<i64: 32, 128>}, {pipeline_mode = #tpu.pipeline_mode<synchronous>, transform_indices = @transform_3, window_bounds = array<i64: 1, 128>}, {pipeline_mode = #tpu.pipeline_mode<synchronous>, transform_indices = @transform_4, window_bounds = array<i64: 8, 2>}, {pipeline_mode = #tpu.pipeline_mode<synchronous>, transform_indices = @transform_5, window_bounds = array<i64: 32, 32>}, {pipeline_mode = #tpu.pipeline_mode<synchronous>, transform_indices = @transform_6, window_bounds = array<i64: 1, 32>}, {pipeline_mode = #tpu.pipeline_mode<synchronous>, transform_indices = @transform_7, window_bounds = array<i64: 2, 32>}, {pipeline_mode = #tpu.pipeline_mode<synchronous>, transform_indices = @transform_8, window_bounds = array<i64: 1, 32>}, {pipeline_mode = #tpu.pipeline_mode<synchronous>, transform_indices = @transform_9, window_bounds = array<i64: 32, 128>}, {pipeline_mode = #tpu.pipeline_mode<synchronous>, transform_indices = @transform_10, window_bounds = array<i64: 32, 128>}, {pipeline_mode = #tpu.pipeline_mode<synchronous>, transform_indices = @transform_11, window_bounds = array<i64: 1, 128>}, {pipeline_mode = #tpu.pipeline_mode<synchronous>, transform_indices = @transform_12, window_bounds = array<i64: 8, 128>}]} {
    %c0_i32 = arith.constant 0 : i32
    %0 = arith.cmpi eq, %arg0, %c0_i32 : i32
    %1 = arith.extui %0 : i1 to i32
    %c0_i32_0 = arith.constant 0 : i32
    %2 = arith.cmpi ne, %1, %c0_i32_0 : i32
    scf.if %2 {
      %cst_73 = arith.constant 0.000000e+00 : f32
      %276 = vector.broadcast %cst_73 : f32 to vector<8x32xf32>
      %c0_74 = arith.constant 0 : index
      %c0_75 = arith.constant 0 : index
      %277 = vector.load %arg14[%c0_74, %c0_75] : memref<8x32xf32, #tpu.memory_space<vmem>>, vector<8x32xf32>
      tpu.vector_store %arg14[%c0_74, %c0_75], %276 {strides = array<i32>} : memref<8x32xf32, #tpu.memory_space<vmem>>, vector<8x32xf32>,
      %cst_76 = arith.constant 0.000000e+00 : f32
      %278 = vector.broadcast %cst_76 : f32 to vector<8x32xf32>
      %c0_77 = arith.constant 0 : index
      %c0_78 = arith.constant 0 : index
      %279 = vector.load %arg15[%c0_77, %c0_78] : memref<8x32xf32, #tpu.memory_space<vmem>>, vector<8x32xf32>
      tpu.vector_store %arg15[%c0_77, %c0_78], %278 {strides = array<i32>} : memref<8x32xf32, #tpu.memory_space<vmem>>, vector<8x32xf32>,
      %cst_79 = arith.constant 0xFF800000 : f32
      %280 = vector.broadcast %cst_79 : f32 to vector<8x32xf32>
      %c0_80 = arith.constant 0 : index
      %c0_81 = arith.constant 0 : index
      %281 = vector.load %arg16[%c0_80, %c0_81] : memref<8x32xf32, #tpu.memory_space<vmem>>, vector<8x32xf32>
      tpu.vector_store %arg16[%c0_80, %c0_81], %280 {strides = array<i32>} : memref<8x32xf32, #tpu.memory_space<vmem>>, vector<8x32xf32>,
    } else {
    }
    %c0 = arith.constant 0 : index
    %c0_1 = arith.constant 0 : index
    %3 = vector.load %arg1[%c0, %c0_1] : memref<64x32xf32, #tpu.memory_space<vmem>>, vector<64x32xf32>
    %c0_2 = arith.constant 0 : index
    %c0_3 = arith.constant 0 : index
    %4 = vector.load %arg2[%c0_2, %c0_3] : memref<32x128xf32, #tpu.memory_space<vmem>>, vector<32x128xf32>
    %cst = arith.constant dense<0.000000e+00> : vector<64x128xf32>
    %5 = tpu.matmul %3, %4, %cst {dimension_numbers = #tpu.dot_dimension_numbers<[1], [0], [0], [1], [0, 0, 1, 1], [], []>} : vector<64x32xf32>, vector<32x128xf32>, vector<64x128xf32> -> vector<64x128xf32>
    %c0_4 = arith.constant 0 : index
    %c0_5 = arith.constant 0 : index
    %6 = vector.load %arg4[%c0_4, %c0_5] : memref<1x128xf32, #tpu.memory_space<vmem>>, vector<1x128xf32>
    %7 = vector.broadcast %6 : vector<1x128xf32> to vector<64x128xf32>
    %8 = arith.addf %5, %7 : vector<64x128xf32>
    %c0_6 = arith.constant 0 : index
    %c0_7 = arith.constant 0 : index
    %9 = vector.load %arg17[%c0_6, %c0_7] : memref<64x128xf32, #tpu.memory_space<vmem>>, vector<64x128xf32>
    tpu.vector_store %arg17[%c0_6, %c0_7], %8 {strides = array<i32>} : memref<64x128xf32, #tpu.memory_space<vmem>>, vector<64x128xf32>,
    %c0_8 = arith.constant 0 : index
    %c0_9 = arith.constant 0 : index
    %10 = vector.load %arg3[%c0_8, %c0_9] : memref<32x128xf32, #tpu.memory_space<vmem>>, vector<32x128xf32>
    %c0_10 = arith.constant 0 : index
    %c0_11 = arith.constant 0 : index
    %11 = vector.load %arg14[%c0_10, %c0_11] : memref<8x32xf32, #tpu.memory_space<vmem>>, vector<8x32xf32>
    %c0_12 = arith.constant 0 : index
    %c0_13 = arith.constant 0 : index
    %12 = vector.load %arg15[%c0_12, %c0_13] : memref<8x32xf32, #tpu.memory_space<vmem>>, vector<8x32xf32>
    %c0_14 = arith.constant 0 : index
    %c0_15 = arith.constant 0 : index
    %13 = vector.load %arg16[%c0_14, %c0_15] : memref<8x32xf32, #tpu.memory_space<vmem>>, vector<8x32xf32>
    %c0_i32_16 = arith.constant 0 : i32
    %c8_i32 = arith.constant 8 : i32
    %14 = arith.muli %c0_i32_16, %c8_i32 : i32
    %15 = tpu.assume_multiple %14, 8 : i32
    %16 = arith.index_cast %15 : i32 to index
    %c0_17 = arith.constant 0 : index
    %17 = vector.load %arg17[%16, %c0_17] : memref<64x128xf32, #tpu.memory_space<vmem>>, vector<8x128xf32>
    %cst_18 = arith.constant dense<0.000000e+00> : vector<8x128xf32>
    %18 = tpu.matmul %11, %10, %cst_18 {dimension_numbers = #tpu.dot_dimension_numbers<[1], [0], [0], [1], [0, 0, 1, 1], [], []>} : vector<8x32xf32>, vector<32x128xf32>, vector<8x128xf32> -> vector<8x128xf32>
    %19 = arith.addf %17, %18 : vector<8x128xf32>
    %20 = vector.extract_strided_slice %19 {offsets = [0, 0], sizes = [8, 32], strides = [1, 1]} : vector<8x128xf32> to vector<8x32xf32>
    %21 = arith.negf %20 : vector<8x32xf32>
    %22 = math.exp %21 : vector<8x32xf32>
    %cst_19 = arith.constant 1.000000e+00 : f32
    %23 = vector.broadcast %cst_19 : f32 to vector<8x32xf32>
    %24 = arith.addf %23, %22 : vector<8x32xf32>
    %25 = arith.divf %23, %24 : vector<8x32xf32>
    %26 = vector.extract_strided_slice %19 {offsets = [0, 32], sizes = [8, 32], strides = [1, 1]} : vector<8x128xf32> to vector<8x32xf32>
    %27 = arith.negf %26 : vector<8x32xf32>
    %28 = math.exp %27 : vector<8x32xf32>
    %cst_20 = arith.constant 1.000000e+00 : f32
    %29 = vector.broadcast %cst_20 : f32 to vector<8x32xf32>
    %30 = arith.addf %29, %28 : vector<8x32xf32>
    %31 = arith.divf %29, %30 : vector<8x32xf32>
    %32 = vector.extract_strided_slice %19 {offsets = [0, 64], sizes = [8, 32], strides = [1, 1]} : vector<8x128xf32> to vector<8x32xf32>
    %33 = math.tanh %32 : vector<8x32xf32>
    %34 = vector.extract_strided_slice %19 {offsets = [0, 96], sizes = [8, 32], strides = [1, 1]} : vector<8x128xf32> to vector<8x32xf32>
    %35 = arith.negf %34 : vector<8x32xf32>
    %36 = math.exp %35 : vector<8x32xf32>
    %cst_21 = arith.constant 1.000000e+00 : f32
    %37 = vector.broadcast %cst_21 : f32 to vector<8x32xf32>
    %38 = arith.addf %37, %36 : vector<8x32xf32>
    %39 = arith.divf %37, %38 : vector<8x32xf32>
    %40 = arith.mulf %31, %12 : vector<8x32xf32>
    %41 = arith.mulf %25, %33 : vector<8x32xf32>
    %42 = arith.addf %40, %41 : vector<8x32xf32>
    %43 = math.tanh %42 : vector<8x32xf32>
    %44 = arith.mulf %39, %43 : vector<8x32xf32>
    %45 = arith.maximumf %13, %44 : vector<8x32xf32>
    %c1_i32 = arith.constant 1 : i32
    %c8_i32_22 = arith.constant 8 : i32
    %46 = arith.muli %c1_i32, %c8_i32_22 : i32
    %47 = tpu.assume_multiple %46, 8 : i32
    %48 = arith.index_cast %47 : i32 to index
    %c0_23 = arith.constant 0 : index
    %49 = vector.load %arg17[%48, %c0_23] : memref<64x128xf32, #tpu.memory_space<vmem>>, vector<8x128xf32>
    %cst_24 = arith.constant dense<0.000000e+00> : vector<8x128xf32>
    %50 = tpu.matmul %44, %10, %cst_24 {dimension_numbers = #tpu.dot_dimension_numbers<[1], [0], [0], [1], [0, 0, 1, 1], [], []>} : vector<8x32xf32>, vector<32x128xf32>, vector<8x128xf32> -> vector<8x128xf32>
    %51 = arith.addf %49, %50 : vector<8x128xf32>
    %52 = vector.extract_strided_slice %51 {offsets = [0, 0], sizes = [8, 32], strides = [1, 1]} : vector<8x128xf32> to vector<8x32xf32>
    %53 = arith.negf %52 : vector<8x32xf32>
    %54 = math.exp %53 : vector<8x32xf32>
    %cst_25 = arith.constant 1.000000e+00 : f32
    %55 = vector.broadcast %cst_25 : f32 to vector<8x32xf32>
    %56 = arith.addf %55, %54 : vector<8x32xf32>
    %57 = arith.divf %55, %56 : vector<8x32xf32>
    %58 = vector.extract_strided_slice %51 {offsets = [0, 32], sizes = [8, 32], strides = [1, 1]} : vector<8x128xf32> to vector<8x32xf32>
    %59 = arith.negf %58 : vector<8x32xf32>
    %60 = math.exp %59 : vector<8x32xf32>
    %cst_26 = arith.constant 1.000000e+00 : f32
    %61 = vector.broadcast %cst_26 : f32 to vector<8x32xf32>
    %62 = arith.addf %61, %60 : vector<8x32xf32>
    %63 = arith.divf %61, %62 : vector<8x32xf32>
    %64 = vector.extract_strided_slice %51 {offsets = [0, 64], sizes = [8, 32], strides = [1, 1]} : vector<8x128xf32> to vector<8x32xf32>
    %65 = math.tanh %64 : vector<8x32xf32>
    %66 = vector.extract_strided_slice %51 {offsets = [0, 96], sizes = [8, 32], strides = [1, 1]} : vector<8x128xf32> to vector<8x32xf32>
    %67 = arith.negf %66 : vector<8x32xf32>
    %68 = math.exp %67 : vector<8x32xf32>
    %cst_27 = arith.constant 1.000000e+00 : f32
    %69 = vector.broadcast %cst_27 : f32 to vector<8x32xf32>
    %70 = arith.addf %69, %68 : vector<8x32xf32>
    %71 = arith.divf %69, %70 : vector<8x32xf32>
    %72 = arith.mulf %63, %42 : vector<8x32xf32>
    %73 = arith.mulf %57, %65 : vector<8x32xf32>
    %74 = arith.addf %72, %73 : vector<8x32xf32>
    %75 = math.tanh %74 : vector<8x32xf32>
    %76 = arith.mulf %71, %75 : vector<8x32xf32>
    %77 = arith.maximumf %45, %76 : vector<8x32xf32>
    %c2_i32 = arith.constant 2 : i32
    %c8_i32_28 = arith.constant 8 : i32
    %78 = arith.muli %c2_i32, %c8_i32_28 : i32
    %79 = tpu.assume_multiple %78, 8 : i32
    %80 = arith.index_cast %79 : i32 to index
    %c0_29 = arith.constant 0 : index
    %81 = vector.load %arg17[%80, %c0_29] : memref<64x128xf32, #tpu.memory_space<vmem>>, vector<8x128xf32>
    %cst_30 = arith.constant dense<0.000000e+00> : vector<8x128xf32>
    %82 = tpu.matmul %76, %10, %cst_30 {dimension_numbers = #tpu.dot_dimension_numbers<[1], [0], [0], [1], [0, 0, 1, 1], [], []>} : vector<8x32xf32>, vector<32x128xf32>, vector<8x128xf32> -> vector<8x128xf32>
    %83 = arith.addf %81, %82 : vector<8x128xf32>
    %84 = vector.extract_strided_slice %83 {offsets = [0, 0], sizes = [8, 32], strides = [1, 1]} : vector<8x128xf32> to vector<8x32xf32>
    %85 = arith.negf %84 : vector<8x32xf32>
    %86 = math.exp %85 : vector<8x32xf32>
    %cst_31 = arith.constant 1.000000e+00 : f32
    %87 = vector.broadcast %cst_31 : f32 to vector<8x32xf32>
    %88 = arith.addf %87, %86 : vector<8x32xf32>
    %89 = arith.divf %87, %88 : vector<8x32xf32>
    %90 = vector.extract_strided_slice %83 {offsets = [0, 32], sizes = [8, 32], strides = [1, 1]} : vector<8x128xf32> to vector<8x32xf32>
    %91 = arith.negf %90 : vector<8x32xf32>
    %92 = math.exp %91 : vector<8x32xf32>
    %cst_32 = arith.constant 1.000000e+00 : f32
    %93 = vector.broadcast %cst_32 : f32 to vector<8x32xf32>
    %94 = arith.addf %93, %92 : vector<8x32xf32>
    %95 = arith.divf %93, %94 : vector<8x32xf32>
    %96 = vector.extract_strided_slice %83 {offsets = [0, 64], sizes = [8, 32], strides = [1, 1]} : vector<8x128xf32> to vector<8x32xf32>
    %97 = math.tanh %96 : vector<8x32xf32>
    %98 = vector.extract_strided_slice %83 {offsets = [0, 96], sizes = [8, 32], strides = [1, 1]} : vector<8x128xf32> to vector<8x32xf32>
    %99 = arith.negf %98 : vector<8x32xf32>
    %100 = math.exp %99 : vector<8x32xf32>
    %cst_33 = arith.constant 1.000000e+00 : f32
    %101 = vector.broadcast %cst_33 : f32 to vector<8x32xf32>
    %102 = arith.addf %101, %100 : vector<8x32xf32>
    %103 = arith.divf %101, %102 : vector<8x32xf32>
    %104 = arith.mulf %95, %74 : vector<8x32xf32>
    %105 = arith.mulf %89, %97 : vector<8x32xf32>
    %106 = arith.addf %104, %105 : vector<8x32xf32>
    %107 = math.tanh %106 : vector<8x32xf32>
    %108 = arith.mulf %103, %107 : vector<8x32xf32>
    %109 = arith.maximumf %77, %108 : vector<8x32xf32>
    %c3_i32 = arith.constant 3 : i32
    %c8_i32_34 = arith.constant 8 : i32
    %110 = arith.muli %c3_i32, %c8_i32_34 : i32
    %111 = tpu.assume_multiple %110, 8 : i32
    %112 = arith.index_cast %111 : i32 to index
    %c0_35 = arith.constant 0 : index
    %113 = vector.load %arg17[%112, %c0_35] : memref<64x128xf32, #tpu.memory_space<vmem>>, vector<8x128xf32>
    %cst_36 = arith.constant dense<0.000000e+00> : vector<8x128xf32>
    %114 = tpu.matmul %108, %10, %cst_36 {dimension_numbers = #tpu.dot_dimension_numbers<[1], [0], [0], [1], [0, 0, 1, 1], [], []>} : vector<8x32xf32>, vector<32x128xf32>, vector<8x128xf32> -> vector<8x128xf32>
    %115 = arith.addf %113, %114 : vector<8x128xf32>
    %116 = vector.extract_strided_slice %115 {offsets = [0, 0], sizes = [8, 32], strides = [1, 1]} : vector<8x128xf32> to vector<8x32xf32>
    %117 = arith.negf %116 : vector<8x32xf32>
    %118 = math.exp %117 : vector<8x32xf32>
    %cst_37 = arith.constant 1.000000e+00 : f32
    %119 = vector.broadcast %cst_37 : f32 to vector<8x32xf32>
    %120 = arith.addf %119, %118 : vector<8x32xf32>
    %121 = arith.divf %119, %120 : vector<8x32xf32>
    %122 = vector.extract_strided_slice %115 {offsets = [0, 32], sizes = [8, 32], strides = [1, 1]} : vector<8x128xf32> to vector<8x32xf32>
    %123 = arith.negf %122 : vector<8x32xf32>
    %124 = math.exp %123 : vector<8x32xf32>
    %cst_38 = arith.constant 1.000000e+00 : f32
    %125 = vector.broadcast %cst_38 : f32 to vector<8x32xf32>
    %126 = arith.addf %125, %124 : vector<8x32xf32>
    %127 = arith.divf %125, %126 : vector<8x32xf32>
    %128 = vector.extract_strided_slice %115 {offsets = [0, 64], sizes = [8, 32], strides = [1, 1]} : vector<8x128xf32> to vector<8x32xf32>
    %129 = math.tanh %128 : vector<8x32xf32>
    %130 = vector.extract_strided_slice %115 {offsets = [0, 96], sizes = [8, 32], strides = [1, 1]} : vector<8x128xf32> to vector<8x32xf32>
    %131 = arith.negf %130 : vector<8x32xf32>
    %132 = math.exp %131 : vector<8x32xf32>
    %cst_39 = arith.constant 1.000000e+00 : f32
    %133 = vector.broadcast %cst_39 : f32 to vector<8x32xf32>
    %134 = arith.addf %133, %132 : vector<8x32xf32>
    %135 = arith.divf %133, %134 : vector<8x32xf32>
    %136 = arith.mulf %127, %106 : vector<8x32xf32>
    %137 = arith.mulf %121, %129 : vector<8x32xf32>
    %138 = arith.addf %136, %137 : vector<8x32xf32>
    %139 = math.tanh %138 : vector<8x32xf32>
    %140 = arith.mulf %135, %139 : vector<8x32xf32>
    %141 = arith.maximumf %109, %140 : vector<8x32xf32>
    %c4_i32 = arith.constant 4 : i32
    %c8_i32_40 = arith.constant 8 : i32
    %142 = arith.muli %c4_i32, %c8_i32_40 : i32
    %143 = tpu.assume_multiple %142, 8 : i32
    %144 = arith.index_cast %143 : i32 to index
    %c0_41 = arith.constant 0 : index
    %145 = vector.load %arg17[%144, %c0_41] : memref<64x128xf32, #tpu.memory_space<vmem>>, vector<8x128xf32>
    %cst_42 = arith.constant dense<0.000000e+00> : vector<8x128xf32>
    %146 = tpu.matmul %140, %10, %cst_42 {dimension_numbers = #tpu.dot_dimension_numbers<[1], [0], [0], [1], [0, 0, 1, 1], [], []>} : vector<8x32xf32>, vector<32x128xf32>, vector<8x128xf32> -> vector<8x128xf32>
    %147 = arith.addf %145, %146 : vector<8x128xf32>
    %148 = vector.extract_strided_slice %147 {offsets = [0, 0], sizes = [8, 32], strides = [1, 1]} : vector<8x128xf32> to vector<8x32xf32>
    %149 = arith.negf %148 : vector<8x32xf32>
    %150 = math.exp %149 : vector<8x32xf32>
    %cst_43 = arith.constant 1.000000e+00 : f32
    %151 = vector.broadcast %cst_43 : f32 to vector<8x32xf32>
    %152 = arith.addf %151, %150 : vector<8x32xf32>
    %153 = arith.divf %151, %152 : vector<8x32xf32>
    %154 = vector.extract_strided_slice %147 {offsets = [0, 32], sizes = [8, 32], strides = [1, 1]} : vector<8x128xf32> to vector<8x32xf32>
    %155 = arith.negf %154 : vector<8x32xf32>
    %156 = math.exp %155 : vector<8x32xf32>
    %cst_44 = arith.constant 1.000000e+00 : f32
    %157 = vector.broadcast %cst_44 : f32 to vector<8x32xf32>
    %158 = arith.addf %157, %156 : vector<8x32xf32>
    %159 = arith.divf %157, %158 : vector<8x32xf32>
    %160 = vector.extract_strided_slice %147 {offsets = [0, 64], sizes = [8, 32], strides = [1, 1]} : vector<8x128xf32> to vector<8x32xf32>
    %161 = math.tanh %160 : vector<8x32xf32>
    %162 = vector.extract_strided_slice %147 {offsets = [0, 96], sizes = [8, 32], strides = [1, 1]} : vector<8x128xf32> to vector<8x32xf32>
    %163 = arith.negf %162 : vector<8x32xf32>
    %164 = math.exp %163 : vector<8x32xf32>
    %cst_45 = arith.constant 1.000000e+00 : f32
    %165 = vector.broadcast %cst_45 : f32 to vector<8x32xf32>
    %166 = arith.addf %165, %164 : vector<8x32xf32>
    %167 = arith.divf %165, %166 : vector<8x32xf32>
    %168 = arith.mulf %159, %138 : vector<8x32xf32>
    %169 = arith.mulf %153, %161 : vector<8x32xf32>
    %170 = arith.addf %168, %169 : vector<8x32xf32>
    %171 = math.tanh %170 : vector<8x32xf32>
    %172 = arith.mulf %167, %171 : vector<8x32xf32>
    %173 = arith.maximumf %141, %172 : vector<8x32xf32>
    %c5_i32 = arith.constant 5 : i32
    %c8_i32_46 = arith.constant 8 : i32
    %174 = arith.muli %c5_i32, %c8_i32_46 : i32
    %175 = tpu.assume_multiple %174, 8 : i32
    %176 = arith.index_cast %175 : i32 to index
    %c0_47 = arith.constant 0 : index
    %177 = vector.load %arg17[%176, %c0_47] : memref<64x128xf32, #tpu.memory_space<vmem>>, vector<8x128xf32>
    %cst_48 = arith.constant dense<0.000000e+00> : vector<8x128xf32>
    %178 = tpu.matmul %172, %10, %cst_48 {dimension_numbers = #tpu.dot_dimension_numbers<[1], [0], [0], [1], [0, 0, 1, 1], [], []>} : vector<8x32xf32>, vector<32x128xf32>, vector<8x128xf32> -> vector<8x128xf32>
    %179 = arith.addf %177, %178 : vector<8x128xf32>
    %180 = vector.extract_strided_slice %179 {offsets = [0, 0], sizes = [8, 32], strides = [1, 1]} : vector<8x128xf32> to vector<8x32xf32>
    %181 = arith.negf %180 : vector<8x32xf32>
    %182 = math.exp %181 : vector<8x32xf32>
    %cst_49 = arith.constant 1.000000e+00 : f32
    %183 = vector.broadcast %cst_49 : f32 to vector<8x32xf32>
    %184 = arith.addf %183, %182 : vector<8x32xf32>
    %185 = arith.divf %183, %184 : vector<8x32xf32>
    %186 = vector.extract_strided_slice %179 {offsets = [0, 32], sizes = [8, 32], strides = [1, 1]} : vector<8x128xf32> to vector<8x32xf32>
    %187 = arith.negf %186 : vector<8x32xf32>
    %188 = math.exp %187 : vector<8x32xf32>
    %cst_50 = arith.constant 1.000000e+00 : f32
    %189 = vector.broadcast %cst_50 : f32 to vector<8x32xf32>
    %190 = arith.addf %189, %188 : vector<8x32xf32>
    %191 = arith.divf %189, %190 : vector<8x32xf32>
    %192 = vector.extract_strided_slice %179 {offsets = [0, 64], sizes = [8, 32], strides = [1, 1]} : vector<8x128xf32> to vector<8x32xf32>
    %193 = math.tanh %192 : vector<8x32xf32>
    %194 = vector.extract_strided_slice %179 {offsets = [0, 96], sizes = [8, 32], strides = [1, 1]} : vector<8x128xf32> to vector<8x32xf32>
    %195 = arith.negf %194 : vector<8x32xf32>
    %196 = math.exp %195 : vector<8x32xf32>
    %cst_51 = arith.constant 1.000000e+00 : f32
    %197 = vector.broadcast %cst_51 : f32 to vector<8x32xf32>
    %198 = arith.addf %197, %196 : vector<8x32xf32>
    %199 = arith.divf %197, %198 : vector<8x32xf32>
    %200 = arith.mulf %191, %170 : vector<8x32xf32>
    %201 = arith.mulf %185, %193 : vector<8x32xf32>
    %202 = arith.addf %200, %201 : vector<8x32xf32>
    %203 = math.tanh %202 : vector<8x32xf32>
    %204 = arith.mulf %199, %203 : vector<8x32xf32>
    %205 = arith.maximumf %173, %204 : vector<8x32xf32>
    %c6_i32 = arith.constant 6 : i32
    %c8_i32_52 = arith.constant 8 : i32
    %206 = arith.muli %c6_i32, %c8_i32_52 : i32
    %207 = tpu.assume_multiple %206, 8 : i32
    %208 = arith.index_cast %207 : i32 to index
    %c0_53 = arith.constant 0 : index
    %209 = vector.load %arg17[%208, %c0_53] : memref<64x128xf32, #tpu.memory_space<vmem>>, vector<8x128xf32>
    %cst_54 = arith.constant dense<0.000000e+00> : vector<8x128xf32>
    %210 = tpu.matmul %204, %10, %cst_54 {dimension_numbers = #tpu.dot_dimension_numbers<[1], [0], [0], [1], [0, 0, 1, 1], [], []>} : vector<8x32xf32>, vector<32x128xf32>, vector<8x128xf32> -> vector<8x128xf32>
    %211 = arith.addf %209, %210 : vector<8x128xf32>
    %212 = vector.extract_strided_slice %211 {offsets = [0, 0], sizes = [8, 32], strides = [1, 1]} : vector<8x128xf32> to vector<8x32xf32>
    %213 = arith.negf %212 : vector<8x32xf32>
    %214 = math.exp %213 : vector<8x32xf32>
    %cst_55 = arith.constant 1.000000e+00 : f32
    %215 = vector.broadcast %cst_55 : f32 to vector<8x32xf32>
    %216 = arith.addf %215, %214 : vector<8x32xf32>
    %217 = arith.divf %215, %216 : vector<8x32xf32>
    %218 = vector.extract_strided_slice %211 {offsets = [0, 32], sizes = [8, 32], strides = [1, 1]} : vector<8x128xf32> to vector<8x32xf32>
    %219 = arith.negf %218 : vector<8x32xf32>
    %220 = math.exp %219 : vector<8x32xf32>
    %cst_56 = arith.constant 1.000000e+00 : f32
    %221 = vector.broadcast %cst_56 : f32 to vector<8x32xf32>
    %222 = arith.addf %221, %220 : vector<8x32xf32>
    %223 = arith.divf %221, %222 : vector<8x32xf32>
    %224 = vector.extract_strided_slice %211 {offsets = [0, 64], sizes = [8, 32], strides = [1, 1]} : vector<8x128xf32> to vector<8x32xf32>
    %225 = math.tanh %224 : vector<8x32xf32>
    %226 = vector.extract_strided_slice %211 {offsets = [0, 96], sizes = [8, 32], strides = [1, 1]} : vector<8x128xf32> to vector<8x32xf32>
    %227 = arith.negf %226 : vector<8x32xf32>
    %228 = math.exp %227 : vector<8x32xf32>
    %cst_57 = arith.constant 1.000000e+00 : f32
    %229 = vector.broadcast %cst_57 : f32 to vector<8x32xf32>
    %230 = arith.addf %229, %228 : vector<8x32xf32>
    %231 = arith.divf %229, %230 : vector<8x32xf32>
    %232 = arith.mulf %223, %202 : vector<8x32xf32>
    %233 = arith.mulf %217, %225 : vector<8x32xf32>
    %234 = arith.addf %232, %233 : vector<8x32xf32>
    %235 = math.tanh %234 : vector<8x32xf32>
    %236 = arith.mulf %231, %235 : vector<8x32xf32>
    %237 = arith.maximumf %205, %236 : vector<8x32xf32>
    %c7_i32 = arith.constant 7 : i32
    %c8_i32_58 = arith.constant 8 : i32
    %238 = arith.muli %c7_i32, %c8_i32_58 : i32
    %239 = tpu.assume_multiple %238, 8 : i32
    %240 = arith.index_cast %239 : i32 to index
    %c0_59 = arith.constant 0 : index
    %241 = vector.load %arg17[%240, %c0_59] : memref<64x128xf32, #tpu.memory_space<vmem>>, vector<8x128xf32>
    %cst_60 = arith.constant dense<0.000000e+00> : vector<8x128xf32>
    %242 = tpu.matmul %236, %10, %cst_60 {dimension_numbers = #tpu.dot_dimension_numbers<[1], [0], [0], [1], [0, 0, 1, 1], [], []>} : vector<8x32xf32>, vector<32x128xf32>, vector<8x128xf32> -> vector<8x128xf32>
    %243 = arith.addf %241, %242 : vector<8x128xf32>
    %244 = vector.extract_strided_slice %243 {offsets = [0, 0], sizes = [8, 32], strides = [1, 1]} : vector<8x128xf32> to vector<8x32xf32>
    %245 = arith.negf %244 : vector<8x32xf32>
    %246 = math.exp %245 : vector<8x32xf32>
    %cst_61 = arith.constant 1.000000e+00 : f32
    %247 = vector.broadcast %cst_61 : f32 to vector<8x32xf32>
    %248 = arith.addf %247, %246 : vector<8x32xf32>
    %249 = arith.divf %247, %248 : vector<8x32xf32>
    %250 = vector.extract_strided_slice %243 {offsets = [0, 32], sizes = [8, 32], strides = [1, 1]} : vector<8x128xf32> to vector<8x32xf32>
    %251 = arith.negf %250 : vector<8x32xf32>
    %252 = math.exp %251 : vector<8x32xf32>
    %cst_62 = arith.constant 1.000000e+00 : f32
    %253 = vector.broadcast %cst_62 : f32 to vector<8x32xf32>
    %254 = arith.addf %253, %252 : vector<8x32xf32>
    %255 = arith.divf %253, %254 : vector<8x32xf32>
    %256 = vector.extract_strided_slice %243 {offsets = [0, 64], sizes = [8, 32], strides = [1, 1]} : vector<8x128xf32> to vector<8x32xf32>
    %257 = math.tanh %256 : vector<8x32xf32>
    %258 = vector.extract_strided_slice %243 {offsets = [0, 96], sizes = [8, 32], strides = [1, 1]} : vector<8x128xf32> to vector<8x32xf32>
    %259 = arith.negf %258 : vector<8x32xf32>
    %260 = math.exp %259 : vector<8x32xf32>
    %cst_63 = arith.constant 1.000000e+00 : f32
    %261 = vector.broadcast %cst_63 : f32 to vector<8x32xf32>
    %262 = arith.addf %261, %260 : vector<8x32xf32>
    %263 = arith.divf %261, %262 : vector<8x32xf32>
    %264 = arith.mulf %255, %234 : vector<8x32xf32>
    %265 = arith.mulf %249, %257 : vector<8x32xf32>
    %266 = arith.addf %264, %265 : vector<8x32xf32>
    %267 = math.tanh %266 : vector<8x32xf32>
    %268 = arith.mulf %263, %267 : vector<8x32xf32>
    %269 = arith.maximumf %237, %268 : vector<8x32xf32>
    %c8_i32_64 = arith.constant 8 : i32
    %c0_65 = arith.constant 0 : index
    %c0_66 = arith.constant 0 : index
    %270 = vector.load %arg14[%c0_65, %c0_66] : memref<8x32xf32, #tpu.memory_space<vmem>>, vector<8x32xf32>
    tpu.vector_store %arg14[%c0_65, %c0_66], %268 {strides = array<i32>} : memref<8x32xf32, #tpu.memory_space<vmem>>, vector<8x32xf32>,
    %c0_67 = arith.constant 0 : index
    %c0_68 = arith.constant 0 : index
    %271 = vector.load %arg15[%c0_67, %c0_68] : memref<8x32xf32, #tpu.memory_space<vmem>>, vector<8x32xf32>
    tpu.vector_store %arg15[%c0_67, %c0_68], %266 {strides = array<i32>} : memref<8x32xf32, #tpu.memory_space<vmem>>, vector<8x32xf32>,
    %c0_69 = arith.constant 0 : index
    %c0_70 = arith.constant 0 : index
    %272 = vector.load %arg16[%c0_69, %c0_70] : memref<8x32xf32, #tpu.memory_space<vmem>>, vector<8x32xf32>
    tpu.vector_store %arg16[%c0_69, %c0_70], %269 {strides = array<i32>} : memref<8x32xf32, #tpu.memory_space<vmem>>, vector<8x32xf32>,
    %c0_i32_71 = arith.constant 0 : i32
    %273 = arith.cmpi eq, %arg0, %c0_i32_71 : i32
    %274 = arith.extui %273 : i1 to i32
    %c0_i32_72 = arith.constant 0 : i32
    %275 = arith.cmpi ne, %274, %c0_i32_72 : i32
    scf.if %275 {
      %c0_73 = arith.constant 0 : index
      %c0_74 = arith.constant 0 : index
      %276 = vector.load %arg16[%c0_73, %c0_74] : memref<8x32xf32, #tpu.memory_space<vmem>>, vector<8x32xf32>
      %277 = math.tanh %276 : vector<8x32xf32>
      %c0_75 = arith.constant 0 : index
      %c0_76 = arith.constant 0 : index
      %278 = vector.load %arg6[%c0_75, %c0_76] : memref<32x32xf32, #tpu.memory_space<vmem>>, vector<32x32xf32>
      %cst_77 = arith.constant dense<0.000000e+00> : vector<8x32xf32>
      %279 = tpu.matmul %277, %278, %cst_77 {dimension_numbers = #tpu.dot_dimension_numbers<[1], [0], [0], [1], [0, 0, 1, 1], [], []>} : vector<8x32xf32>, vector<32x32xf32>, vector<8x32xf32> -> vector<8x32xf32>
      %c0_78 = arith.constant 0 : index
      %c0_79 = arith.constant 0 : index
      %280 = vector.load %arg7[%c0_78, %c0_79] : memref<1x32xf32, #tpu.memory_space<vmem>>, vector<1x32xf32>
      %281 = vector.broadcast %280 : vector<1x32xf32> to vector<8x32xf32>
      %282 = arith.addf %279, %281 : vector<8x32xf32>
      %c0_80 = arith.constant 0 : index
      %c0_81 = arith.constant 0 : index
      %283 = vector.load %arg5[%c0_80, %c0_81] : memref<8x2xf32, #tpu.memory_space<vmem>>, vector<8x2xf32>
      %c0_82 = arith.constant 0 : index
      %c0_83 = arith.constant 0 : index
      %284 = vector.load %arg8[%c0_82, %c0_83] : memref<2x32xf32, #tpu.memory_space<vmem>>, vector<2x32xf32>
      %cst_84 = arith.constant dense<0.000000e+00> : vector<8x32xf32>
      %285 = tpu.matmul %283, %284, %cst_84 {dimension_numbers = #tpu.dot_dimension_numbers<[1], [0], [0], [1], [0, 0, 1, 1], [], []>} : vector<8x2xf32>, vector<2x32xf32>, vector<8x32xf32> -> vector<8x32xf32>
      %c0_85 = arith.constant 0 : index
      %c0_86 = arith.constant 0 : index
      %286 = vector.load %arg9[%c0_85, %c0_86] : memref<1x32xf32, #tpu.memory_space<vmem>>, vector<1x32xf32>
      %287 = vector.broadcast %286 : vector<1x32xf32> to vector<8x32xf32>
      %288 = arith.addf %285, %287 : vector<8x32xf32>
      %289 = math.tanh %288 : vector<8x32xf32>
      %290 = math.tanh %282 : vector<8x32xf32>
      %c0_87 = arith.constant 0 : index
      %c0_88 = arith.constant 0 : index
      %291 = vector.load %arg10[%c0_87, %c0_88] : memref<32x128xf32, #tpu.memory_space<vmem>>, vector<32x128xf32>
      %cst_89 = arith.constant dense<0.000000e+00> : vector<8x128xf32>
      %292 = tpu.matmul %290, %291, %cst_89 {dimension_numbers = #tpu.dot_dimension_numbers<[1], [0], [0], [1], [0, 0, 1, 1], [], []>} : vector<8x32xf32>, vector<32x128xf32>, vector<8x128xf32> -> vector<8x128xf32>
      %293 = math.tanh %289 : vector<8x32xf32>
      %c0_90 = arith.constant 0 : index
      %c0_91 = arith.constant 0 : index
      %294 = vector.load %arg11[%c0_90, %c0_91] : memref<32x128xf32, #tpu.memory_space<vmem>>, vector<32x128xf32>
      %cst_92 = arith.constant dense<0.000000e+00> : vector<8x128xf32>
      %295 = tpu.matmul %293, %294, %cst_92 {dimension_numbers = #tpu.dot_dimension_numbers<[1], [0], [0], [1], [0, 0, 1, 1], [], []>} : vector<8x32xf32>, vector<32x128xf32>, vector<8x128xf32> -> vector<8x128xf32>
      %296 = arith.addf %292, %295 : vector<8x128xf32>
      %c0_93 = arith.constant 0 : index
      %c0_94 = arith.constant 0 : index
      %297 = vector.load %arg12[%c0_93, %c0_94] : memref<1x128xf32, #tpu.memory_space<vmem>>, vector<1x128xf32>
      %298 = vector.broadcast %297 : vector<1x128xf32> to vector<8x128xf32>
      %299 = arith.addf %296, %298 : vector<8x128xf32>
      %c0_95 = arith.constant 0 : index
      %c0_96 = arith.constant 0 : index
      %300 = vector.load %arg13[%c0_95, %c0_96] : memref<8x128xf32, #tpu.memory_space<vmem>>, vector<8x128xf32>
      tpu.vector_store %arg13[%c0_95, %c0_96], %299 {strides = array<i32>} : memref<8x128xf32, #tpu.memory_space<vmem>>, vector<8x128xf32>,
    } else {
    }
    return
  }
  func.func @transform_0(%arg0: i32) -> (i32, i32) {
    %c0_i32 = arith.constant 0 : i32
    %c0_i32_0 = arith.constant 0 : i32
    return %arg0, %c0_i32 : i32, i32
  }
  func.func @transform_1(%arg0: i32) -> (i32, i32) {
    %c0_i32 = arith.constant 0 : i32
    %c0_i32_0 = arith.constant 0 : i32
    %c0_i32_1 = arith.constant 0 : i32
    return %c0_i32, %c0_i32_0 : i32, i32
  }
  func.func @transform_2(%arg0: i32) -> (i32, i32) {
    %c0_i32 = arith.constant 0 : i32
    %c0_i32_0 = arith.constant 0 : i32
    %c0_i32_1 = arith.constant 0 : i32
    return %c0_i32, %c0_i32_0 : i32, i32
  }
  func.func @transform_3(%arg0: i32) -> (i32, i32) {
    %c0_i32 = arith.constant 0 : i32
    %c0_i32_0 = arith.constant 0 : i32
    %c0_i32_1 = arith.constant 0 : i32
    return %c0_i32, %c0_i32_0 : i32, i32
  }
  func.func @transform_4(%arg0: i32) -> (i32, i32) {
    %c0_i32 = arith.constant 0 : i32
    %c0_i32_0 = arith.constant 0 : i32
    %c0_i32_1 = arith.constant 0 : i32
    return %c0_i32, %c0_i32_0 : i32, i32
  }
  func.func @transform_5(%arg0: i32) -> (i32, i32) {
    %c0_i32 = arith.constant 0 : i32
    %c0_i32_0 = arith.constant 0 : i32
    %c0_i32_1 = arith.constant 0 : i32
    return %c0_i32, %c0_i32_0 : i32, i32
  }
  func.func @transform_6(%arg0: i32) -> (i32, i32) {
    %c0_i32 = arith.constant 0 : i32
    %c0_i32_0 = arith.constant 0 : i32
    %c0_i32_1 = arith.constant 0 : i32
    return %c0_i32, %c0_i32_0 : i32, i32
  }
  func.func @transform_7(%arg0: i32) -> (i32, i32) {
    %c0_i32 = arith.constant 0 : i32
    %c0_i32_0 = arith.constant 0 : i32
    %c0_i32_1 = arith.constant 0 : i32
    return %c0_i32, %c0_i32_0 : i32, i32
  }
  func.func @transform_8(%arg0: i32) -> (i32, i32) {
    %c0_i32 = arith.constant 0 : i32
    %c0_i32_0 = arith.constant 0 : i32
    %c0_i32_1 = arith.constant 0 : i32
    return %c0_i32, %c0_i32_0 : i32, i32
  }
  func.func @transform_9(%arg0: i32) -> (i32, i32) {
    %c0_i32 = arith.constant 0 : i32
    %c0_i32_0 = arith.constant 0 : i32
    %c0_i32_1 = arith.constant 0 : i32
    return %c0_i32, %c0_i32_0 : i32, i32
  }
  func.func @transform_10(%arg0: i32) -> (i32, i32) {
    %c0_i32 = arith.constant 0 : i32
    %c0_i32_0 = arith.constant 0 : i32
    %c0_i32_1 = arith.constant 0 : i32
    return %c0_i32, %c0_i32_0 : i32, i32
  }
  func.func @transform_11(%arg0: i32) -> (i32, i32) {
    %c0_i32 = arith.constant 0 : i32
    %c0_i32_0 = arith.constant 0 : i32
    %c0_i32_1 = arith.constant 0 : i32
    return %c0_i32, %c0_i32_0 : i32, i32
  }
  func.func @transform_12(%arg0: i32) -> (i32, i32) {
    %c0_i32 = arith.constant 0 : i32
    %c0_i32_0 = arith.constant 0 : i32
    %c0_i32_1 = arith.constant 0 : i32
    return %c0_i32, %c0_i32_0 : i32, i32
  }
}

</mosaic_0001>

<llo_original>
// kernel: full_word_lm_forward.1
$region0: #{full_word_lm_forward.1}
  #allocation0 [shape = 'u32[]', space=smem, size = 0x4, offset = 0x4, fixed_abs, tag = 'smem constant byte address 0x4 - core index']
  #allocation1 [shape = 'u32[72,128]{1,0:T(1,128)}', space=vmem, size = 0x9000, scoped, tag = 'internal scratch']
  #allocation2 [shape = 'f32[8,32]{1,0:T(8,128)}', space=vmem, size = 0x1000, scoped, tag = 'scratch operand']
  #allocation3 [shape = 'f32[8,32]{1,0:T(8,128)}', space=vmem, size = 0x1000, scoped, tag = 'scratch operand']
  #allocation4 [shape = 'f32[8,32]{1,0:T(8,128)}', space=vmem, size = 0x1000, scoped, tag = 'scratch operand']
  #allocation5 [shape = 'f32[64,128]{1,0:T(8,128)}', space=vmem, size = 0x8000, scoped, tag = 'scratch operand']
  %s0 = inlined_call_operand.vmem [shape: f32[64,32], index: 0, kind: input, shape index: {}]
  %s1 = inlined_call_operand.vmem [shape: f32[32,128], index: 1, kind: input, shape index: {}]
  %s2 = inlined_call_operand.vmem [shape: f32[32,128], index: 2, kind: input, shape index: {}]
  %s3 = inlined_call_operand.vmem [shape: f32[1,128], index: 3, kind: input, shape index: {}]
  %s4 = inlined_call_operand.vmem [shape: f32[8,2], index: 4, kind: input, shape index: {}]
  %s5 = inlined_call_operand.vmem [shape: f32[32,32], index: 5, kind: input, shape index: {}]
  %s6 = inlined_call_operand.vmem [shape: f32[1,32], index: 6, kind: input, shape index: {}]
  %s7 = inlined_call_operand.vmem [shape: f32[2,32], index: 7, kind: input, shape index: {}]
  %s8 = inlined_call_operand.vmem [shape: f32[1,32], index: 8, kind: input, shape index: {}]
  %s9 = inlined_call_operand.vmem [shape: f32[32,128], index: 9, kind: input, shape index: {}]
  %s10 = inlined_call_operand.vmem [shape: f32[32,128], index: 10, kind: input, shape index: {}]
  %s11 = inlined_call_operand.vmem [shape: f32[1,128], index: 11, kind: input, shape index: {}]
  %s12 = inlined_call_operand.vmem [shape: f32[8,128], index: 12, kind: output, shape index: {}]
  %s13 = sld [smem:[#allocation0]]
  $region66: #{full_word_lm_forward.1} parent=0
    _
  %s15 = ssub.s32 1, %s13
  %s16 = scalar_select 0, %s15, %s13
  // Predicated region
  $region2: #{full_word_lm_forward.1} parent=0 // pred_check
    _
  $region3: #{full_word_lm_forward.1} parent=0 // pred_check_branch
    %18 = sbr.rel (0) target = $region5
  $region4: #{full_word_lm_forward.1} parent=0 // pred_region
    _
  $region5: #{full_word_lm_forward.1} parent=0 // pred_fallthru
    _
  // Predicated region
  $region6: #{full_word_lm_forward.1} parent=0 // pred_check
    _
  $region7: #{full_word_lm_forward.1} parent=0 // pred_check_branch
    %20 = sbr.rel (0) target = $region9
  $region8: #{full_word_lm_forward.1} parent=0 // pred_region
    _
  $region9: #{full_word_lm_forward.1} parent=0 // pred_fallthru
    _
  // Predicated region
  $region10: #{full_word_lm_forward.1} parent=0 // pred_check
    _
  $region11: #{full_word_lm_forward.1} parent=0 // pred_check_branch
    %22 = sbr.rel (0) target = $region13
  $region12: #{full_word_lm_forward.1} parent=0 // pred_region
    _
  $region13: #{full_word_lm_forward.1} parent=0 // pred_fallthru
    _
  // Predicated region
  $region14: #{full_word_lm_forward.1} parent=0 // pred_check
    _
  $region15: #{full_word_lm_forward.1} parent=0 // pred_check_branch
    %24 = sbr.rel (0) target = $region17
  $region16: #{full_word_lm_forward.1} parent=0 // pred_region
    _
  $region17: #{full_word_lm_forward.1} parent=0 // pred_fallthru
    _
  // Predicated region
  $region18: #{full_word_lm_forward.1} parent=0 // pred_check
    _
  $region19: #{full_word_lm_forward.1} parent=0 // pred_check_branch
    %26 = sbr.rel (0) target = $region21
  $region20: #{full_word_lm_forward.1} parent=0 // pred_region
    _
  $region21: #{full_word_lm_forward.1} parent=0 // pred_fallthru
    _
  // Predicated region
  $region22: #{full_word_lm_forward.1} parent=0 // pred_check
    _
  $region23: #{full_word_lm_forward.1} parent=0 // pred_check_branch
    %28 = sbr.rel (0) target = $region25
  $region24: #{full_word_lm_forward.1} parent=0 // pred_region
    _
  $region25: #{full_word_lm_forward.1} parent=0 // pred_fallthru
    _
  // Predicated region
  $region26: #{full_word_lm_forward.1} parent=0 // pred_check
    _
  $region27: #{full_word_lm_forward.1} parent=0 // pred_check_branch
    %30 = sbr.rel (0) target = $region29
  $region28: #{full_word_lm_forward.1} parent=0 // pred_region
    _
  $region29: #{full_word_lm_forward.1} parent=0 // pred_fallthru
    _
  // Predicated region
  $region30: #{full_word_lm_forward.1} parent=0 // pred_check
    _
  $region31: #{full_word_lm_forward.1} parent=0 // pred_check_branch
    %32 = sbr.rel (0) target = $region33
  $region32: #{full_word_lm_forward.1} parent=0 // pred_region
    _
  $region33: #{full_word_lm_forward.1} parent=0 // pred_fallthru
    _
  // Predicated region
  $region34: #{full_word_lm_forward.1} parent=0 // pred_check
    _
  $region35: #{full_word_lm_forward.1} parent=0 // pred_check_branch
    %34 = sbr.rel (0) target = $region37
  $region36: #{full_word_lm_forward.1} parent=0 // pred_region
    _
  $region37: #{full_word_lm_forward.1} parent=0 // pred_fallthru
    _
  // Predicated region
  $region38: #{full_word_lm_forward.1} parent=0 // pred_check
    _
  $region39: #{full_word_lm_forward.1} parent=0 // pred_check_branch
    %36 = sbr.rel (0) target = $region41
  $region40: #{full_word_lm_forward.1} parent=0 // pred_region
    _
  $region41: #{full_word_lm_forward.1} parent=0 // pred_fallthru
    _
  // Predicated region
  $region42: #{full_word_lm_forward.1} parent=0 // pred_check
    _
  $region43: #{full_word_lm_forward.1} parent=0 // pred_check_branch
    %38 = sbr.rel (0) target = $region45
  $region44: #{full_word_lm_forward.1} parent=0 // pred_region
    _
  $region45: #{full_word_lm_forward.1} parent=0 // pred_fallthru
    _
  // Predicated region
  $region46: #{full_word_lm_forward.1} parent=0 // pred_check
    _
  $region47: #{full_word_lm_forward.1} parent=0 // pred_check_branch
    %40 = sbr.rel (0) target = $region49
  $region48: #{full_word_lm_forward.1} parent=0 // pred_region
    _
  $region49: #{full_word_lm_forward.1} parent=0 // pred_fallthru
    _
  %p41 = scmp.eq.s32.totalorder 0, 0
  // Predicated region
  $region50: #{full_word_lm_forward.1} parent=0 // pred_check
    %p42 = pneg %p41
  $region51: #{full_word_lm_forward.1} parent=0 // pred_check_branch
    %44 = sbr.rel (%p42) target = $region53
  $region52: #{full_word_lm_forward.1} parent=0 // pred_region
    %vm45 = vcmask 261120
    %46 = vst.msk [vmem:[#allocation2] sm:$0xff] %vm45, 0.0
    %47 = vst.msk [vmem:[#allocation3] sm:$0xff] %vm45, 0.0
    %48 = vst.msk [vmem:[#allocation4] sm:$0xff] %vm45, -inf
  $region53: #{full_word_lm_forward.1} parent=0 // pred_fallthru
    _
  %v49 = vld [vmem:[%s0] sm:$0xff]
  %v50 = vld [vmem:[%s0 + $0x8] sm:$0xff]
  %v51 = vld [vmem:[%s0 + $0x10] sm:$0xff]
  %v52 = vld [vmem:[%s0 + $0x18] sm:$0xff]
  %v53 = vld [vmem:[%s0 + $0x20] sm:$0xff]
  %v54 = vld [vmem:[%s0 + $0x28] sm:$0xff]
  %v55 = vld [vmem:[%s0 + $0x30] sm:$0xff]
  %v56 = vld [vmem:[%s0 + $0x38] sm:$0xff]
  %v57 = vld [vmem:[%s1] sm:$0xff]
  %v58 = vld [vmem:[%s1 + $0x8] sm:$0xff]
  %v59 = vld [vmem:[%s1 + $0x10] sm:$0xff]
  %v60 = vld [vmem:[%s1 + $0x18] sm:$0xff]
  %v61 = vld [vmem:[%s3] sm:$0x1]
  %v63 = vperm.slane %v61, 0
  %vm65 = vcmask 261120
  %v67 = vsel %vm65, %v49, 0
  %v70 = vsel %vm65, %v50, 0
  %v73 = vsel %vm65, %v51, 0
  %v76 = vsel %vm65, %v52, 0
  %v79 = vsel %vm65, %v53, 0
  %v82 = vsel %vm65, %v54, 0
  %v85 = vsel %vm65, %v55, 0
  %v88 = vsel %vm65, %v56, 0
  %90 = vmatpush.msra.mxu0 0.0
  %91 = vmatpush.msra.mxu0 0.0
  %92 = vmatpush.msra.mxu0 0.0
  %93 = vmatpush.msra.mxu0 0.0
  %94 = vmatpush.msra.mxu0 0.0
  %95 = vmatpush.msra.mxu0 0.0
  %96 = vmatpush.msra.mxu0 0.0
  %97 = vmatpush.msra.mxu0 0.0
  %98 = vmatpush.msra.mxu0 0.0
  %99 = vmatpush.msra.mxu0 0.0
  %100 = vmatpush.msra.mxu0 0.0
  %101 = vmatpush.msra.mxu0 0.0
  %102 = vmatpush.msra.mxu0 %v60
  %103 = vmatpush.msra.mxu0 %v59
  %104 = vmatpush.msra.mxu0 %v58
  %105 = vmatpush.msra.mxu0 %v57
  %106 = vmatmul.f32.gmra.mxu0 %v67
  %v107 = vpop.f32.mrf.mxu0
  %v108 = vadd.f32 %v63, %v107
  %109 = vmatmul.f32.gmra.mxu0 %v70
  %v110 = vpop.f32.mrf.mxu0
  %v111 = vadd.f32 %v63, %v110
  %112 = vmatmul.f32.gmra.mxu0 %v73
  %v113 = vpop.f32.mrf.mxu0
  %v114 = vadd.f32 %v63, %v113
  %115 = vmatmul.f32.gmra.mxu0 %v76
  %v116 = vpop.f32.mrf.mxu0
  %v117 = vadd.f32 %v63, %v116
  %118 = vmatmul.f32.gmra.mxu0 %v79
  %v119 = vpop.f32.mrf.mxu0
  %v120 = vadd.f32 %v63, %v119
  %121 = vmatmul.f32.gmra.mxu0 %v82
  %v122 = vpop.f32.mrf.mxu0
  %v123 = vadd.f32 %v63, %v122
  %124 = vmatmul.f32.gmra.mxu0 %v85
  %v125 = vpop.f32.mrf.mxu0
  %v126 = vadd.f32 %v63, %v125
  %127 = vmatmul.f32.gmra.mxu0 %v88
  %v128 = vpop.f32.mrf.mxu0
  %v129 = vadd.f32 %v63, %v128
  %130 = vdwg.mxu0
  %131 = vst [vmem:[#allocation5] sm:$0xff] %v108
  %132 = vst [vmem:[#allocation5 + $0x8] sm:$0xff] %v111
  %133 = vst [vmem:[#allocation5 + $0x10] sm:$0xff] %v114
  %134 = vst [vmem:[#allocation5 + $0x18] sm:$0xff] %v117
  %135 = vst [vmem:[#allocation5 + $0x20] sm:$0xff] %v120
  %136 = vst [vmem:[#allocation5 + $0x28] sm:$0xff] %v123
  %137 = vst [vmem:[#allocation5 + $0x30] sm:$0xff] %v126
  %138 = vst [vmem:[#allocation5 + $0x38] sm:$0xff] %v129
  %v139 = vld [vmem:[%s2] sm:$0xff]
  %v140 = vld [vmem:[%s2 + $0x8] sm:$0xff]
  %v141 = vld [vmem:[%s2 + $0x10] sm:$0xff]
  %v142 = vld [vmem:[%s2 + $0x18] sm:$0xff]
  %v143 = vld [vmem:[#allocation2] sm:$0xff]
  %v144 = vld [vmem:[#allocation3] sm:$0xff]
  %v145 = vld [vmem:[#allocation4] sm:$0xff]
  %v146 = vld [vmem:[#allocation5] sm:$0xff]
  %v148 = vsel %vm65, %v143, 0
  %150 = vmatpush.msra.mxu0 0.0
  %151 = vmatpush.msra.mxu0 0.0
  %152 = vmatpush.msra.mxu0 0.0
  %153 = vmatpush.msra.mxu0 0.0
  %154 = vmatpush.msra.mxu0 0.0
  %155 = vmatpush.msra.mxu0 0.0
  %156 = vmatpush.msra.mxu0 0.0
  %157 = vmatpush.msra.mxu0 0.0
  %158 = vmatpush.msra.mxu0 0.0
  %159 = vmatpush.msra.mxu0 0.0
  %160 = vmatpush.msra.mxu0 0.0
  %161 = vmatpush.msra.mxu0 0.0
  %162 = vmatpush.msra.mxu0 %v142
  %163 = vmatpush.msra.mxu0 %v141
  %164 = vmatpush.msra.mxu0 %v140
  %165 = vmatpush.msra.mxu0 %v139
  %166 = vmatmul.f32.gmra.mxu0 %v148
  %v167 = vpop.f32.mrf.mxu0
  %v168 = vadd.f32 0.0, %v167
  %169 = vdwg.mxu0
  %v170 = vadd.f32 %v146, %v168
  %v171 = vxor.u32 %v170, 2147483648
  %v172 = vmul.f32 %v171, 1.442695
  %v173 = vpow.pop %v172
  %v174 = vadd.f32 %v173, 1.0
  %v175 = vrcp.pop %v174
  %v176 = vmul.f32 %v174, %v175
  %v177 = vsub.f32 1.0, %v176
  %v178 = vmul.f32 %v175, %v177
  %v179 = vadd.f32 %v175, %v178
  %vm180 = vweird.f32 %v174
  %vm181 = vweird.f32 %v175
  %vm182 = vmor %vm180, %vm181
  %v183 = vsel %vm182, %v175, %v179
  %v184 = vand.u32 2147483647, %v174
  %vm185 = vcmp.eq.f32.partialorder %v184, 8.507059e+37
  %v186 = vand.u32 %v174, 2147483648
  %v187 = vor.u32 1.1754944e-38, %v186
  %v188 = vsel %vm185, %v187, %v183
  %v189 = vmul.f32 1.0, %v188
  %v190 = vtanh.pop %v170
  %192 = vrot.lane.b32.xlu0 %v144, 32
  %v193 = vpop.permute.xlu0 %192
  %v195 = vmul.f32 %v189, %v193
  %197 = vrot.lane.b32.xlu0 %v190, 64
  %v198 = vpop.permute.xlu0 %197
  %v200 = vmul.f32 %v189, %v198
  %202 = vrot.lane.b32.xlu0 %v200, 32
  %v203 = vpop.permute.xlu0 %202
  %v205 = vadd.f32 %v195, %v203
  %v206 = vtanh.pop %v205
  %208 = vrot.lane.b32.xlu0 %v206, 64
  %v209 = vpop.permute.xlu0 %208
  %v211 = vmul.f32 %v189, %v209
  %213 = vrot.lane.b32.xlu0 %v211, 32
  %v214 = vpop.permute.xlu0 %213
  %v216 = vmax.f32 %v145, %v214
  %s217 = scalar_lea.vmem [#allocation5], 8
  %v218 = vld [vmem:[%s217] sm:$0xff]
  %v219 = vsel %vm65, %v214, 0
  %221 = vmatpush.msra.mxu0 0.0
  %222 = vmatpush.msra.mxu0 0.0
  %223 = vmatpush.msra.mxu0 0.0
  %224 = vmatpush.msra.mxu0 0.0
  %225 = vmatpush.msra.mxu0 0.0
  %226 = vmatpush.msra.mxu0 0.0
  %227 = vmatpush.msra.mxu0 0.0
  %228 = vmatpush.msra.mxu0 0.0
  %229 = vmatpush.msra.mxu0 0.0
  %230 = vmatpush.msra.mxu0 0.0
  %231 = vmatpush.msra.mxu0 0.0
  %232 = vmatpush.msra.mxu0 0.0
  %233 = vmatpush.msra.mxu0 %v142
  %234 = vmatpush.msra.mxu0 %v141
  %235 = vmatpush.msra.mxu0 %v140
  %236 = vmatpush.msra.mxu0 %v139
  %237 = vmatmul.f32.gmra.mxu0 %v219
  %v238 = vpop.f32.mrf.mxu0
  %v239 = vadd.f32 0.0, %v238
  %240 = vdwg.mxu0
  %v241 = vadd.f32 %v218, %v239
  %v242 = vxor.u32 %v241, 2147483648
  %v243 = vmul.f32 %v242, 1.442695
  %v244 = vpow.pop %v243
  %v245 = vadd.f32 %v244, 1.0
  %v246 = vrcp.pop %v245
  %v247 = vmul.f32 %v245, %v246
  %v248 = vsub.f32 1.0, %v247
  %v249 = vmul.f32 %v246, %v248
  %v250 = vadd.f32 %v246, %v249
  %vm251 = vweird.f32 %v245
  %vm252 = vweird.f32 %v246
  %vm253 = vmor %vm251, %vm252
  %v254 = vsel %vm253, %v246, %v250
  %v255 = vand.u32 2147483647, %v245
  %vm256 = vcmp.eq.f32.partialorder %v255, 8.507059e+37
  %v257 = vand.u32 %v245, 2147483648
  %v258 = vor.u32 1.1754944e-38, %v257
  %v259 = vsel %vm256, %v258, %v254
  %v260 = vmul.f32 1.0, %v259
  %v261 = vtanh.pop %v241
  %v262 = vmul.f32 %v260, %v205
  %264 = vrot.lane.b32.xlu0 %v261, 64
  %v265 = vpop.permute.xlu0 %264
  %v267 = vmul.f32 %v260, %v265
  %269 = vrot.lane.b32.xlu0 %v267, 32
  %v270 = vpop.permute.xlu0 %269
  %v272 = vadd.f32 %v262, %v270
  %v273 = vtanh.pop %v272
  %275 = vrot.lane.b32.xlu0 %v273, 64
  %v276 = vpop.permute.xlu0 %275
  %v278 = vmul.f32 %v260, %v276
  %280 = vrot.lane.b32.xlu0 %v278, 32
  %v281 = vpop.permute.xlu0 %280
  %v283 = vmax.f32 %v216, %v281
  %s284 = scalar_lea.vmem [#allocation5], 16
  %v285 = vld [vmem:[%s284] sm:$0xff]
  %v286 = vsel %vm65, %v281, 0
  %288 = vmatpush.msra.mxu0 0.0
  %289 = vmatpush.msra.mxu0 0.0
  %290 = vmatpush.msra.mxu0 0.0
  %291 = vmatpush.msra.mxu0 0.0
  %292 = vmatpush.msra.mxu0 0.0
  %293 = vmatpush.msra.mxu0 0.0
  %294 = vmatpush.msra.mxu0 0.0
  %295 = vmatpush.msra.mxu0 0.0
  %296 = vmatpush.msra.mxu0 0.0
  %297 = vmatpush.msra.mxu0 0.0
  %298 = vmatpush.msra.mxu0 0.0
  %299 = vmatpush.msra.mxu0 0.0
  %300 = vmatpush.msra.mxu0 %v142
  %301 = vmatpush.msra.mxu0 %v141
  %302 = vmatpush.msra.mxu0 %v140
  %303 = vmatpush.msra.mxu0 %v139
  %304 = vmatmul.f32.gmra.mxu0 %v286
  %v305 = vpop.f32.mrf.mxu0
  %v306 = vadd.f32 0.0, %v305
  %307 = vdwg.mxu0
  %v308 = vadd.f32 %v285, %v306
  %v309 = vxor.u32 %v308, 2147483648
  %v310 = vmul.f32 %v309, 1.442695
  %v311 = vpow.pop %v310
  %v312 = vadd.f32 %v311, 1.0
  %v313 = vrcp.pop %v312
  %v314 = vmul.f32 %v312, %v313
  %v315 = vsub.f32 1.0, %v314
  %v316 = vmul.f32 %v313, %v315
  %v317 = vadd.f32 %v313, %v316
  %vm318 = vweird.f32 %v312
  %vm319 = vweird.f32 %v313
  %vm320 = vmor %vm318, %vm319
  %v321 = vsel %vm320, %v313, %v317
  %v322 = vand.u32 2147483647, %v312
  %vm323 = vcmp.eq.f32.partialorder %v322, 8.507059e+37
  %v324 = vand.u32 %v312, 2147483648
  %v325 = vor.u32 1.1754944e-38, %v324
  %v326 = vsel %vm323, %v325, %v321
  %v327 = vmul.f32 1.0, %v326
  %v328 = vtanh.pop %v308
  %v329 = vmul.f32 %v327, %v272
  %331 = vrot.lane.b32.xlu0 %v328, 64
  %v332 = vpop.permute.xlu0 %331
  %v334 = vmul.f32 %v327, %v332
  %336 = vrot.lane.b32.xlu0 %v334, 32
  %v337 = vpop.permute.xlu0 %336
  %v339 = vadd.f32 %v329, %v337
  %v340 = vtanh.pop %v339
  %342 = vrot.lane.b32.xlu0 %v340, 64
  %v343 = vpop.permute.xlu0 %342
  %v345 = vmul.f32 %v327, %v343
  %347 = vrot.lane.b32.xlu0 %v345, 32
  %v348 = vpop.permute.xlu0 %347
  %v350 = vmax.f32 %v283, %v348
  %s351 = scalar_lea.vmem [#allocation5], 24
  %v352 = vld [vmem:[%s351] sm:$0xff]
  %v353 = vsel %vm65, %v348, 0
  %355 = vmatpush.msra.mxu0 0.0
  %356 = vmatpush.msra.mxu0 0.0
  %357 = vmatpush.msra.mxu0 0.0
  %358 = vmatpush.msra.mxu0 0.0
  %359 = vmatpush.msra.mxu0 0.0
  %360 = vmatpush.msra.mxu0 0.0
  %361 = vmatpush.msra.mxu0 0.0
  %362 = vmatpush.msra.mxu0 0.0
  %363 = vmatpush.msra.mxu0 0.0
  %364 = vmatpush.msra.mxu0 0.0
  %365 = vmatpush.msra.mxu0 0.0
  %366 = vmatpush.msra.mxu0 0.0
  %367 = vmatpush.msra.mxu0 %v142
  %368 = vmatpush.msra.mxu0 %v141
  %369 = vmatpush.msra.mxu0 %v140
  %370 = vmatpush.msra.mxu0 %v139
  %371 = vmatmul.f32.gmra.mxu0 %v353
  %v372 = vpop.f32.mrf.mxu0
  %v373 = vadd.f32 0.0, %v372
  %374 = vdwg.mxu0
  %v375 = vadd.f32 %v352, %v373
  %v376 = vxor.u32 %v375, 2147483648
  %v377 = vmul.f32 %v376, 1.442695
  %v378 = vpow.pop %v377
  %v379 = vadd.f32 %v378, 1.0
  %v380 = vrcp.pop %v379
  %v381 = vmul.f32 %v379, %v380
  %v382 = vsub.f32 1.0, %v381
  %v383 = vmul.f32 %v380, %v382
  %v384 = vadd.f32 %v380, %v383
  %vm385 = vweird.f32 %v379
  %vm386 = vweird.f32 %v380
  %vm387 = vmor %vm385, %vm386
  %v388 = vsel %vm387, %v380, %v384
  %v389 = vand.u32 2147483647, %v379
  %vm390 = vcmp.eq.f32.partialorder %v389, 8.507059e+37
  %v391 = vand.u32 %v379, 2147483648
  %v392 = vor.u32 1.1754944e-38, %v391
  %v393 = vsel %vm390, %v392, %v388
  %v394 = vmul.f32 1.0, %v393
  %v395 = vtanh.pop %v375
  %v396 = vmul.f32 %v394, %v339
  %398 = vrot.lane.b32.xlu0 %v395, 64
  %v399 = vpop.permute.xlu0 %398
  %v401 = vmul.f32 %v394, %v399
  %403 = vrot.lane.b32.xlu0 %v401, 32
  %v404 = vpop.permute.xlu0 %403
  %v406 = vadd.f32 %v396, %v404
  %v407 = vtanh.pop %v406
  %409 = vrot.lane.b32.xlu0 %v407, 64
  %v410 = vpop.permute.xlu0 %409
  %v412 = vmul.f32 %v394, %v410
  %414 = vrot.lane.b32.xlu0 %v412, 32
  %v415 = vpop.permute.xlu0 %414
  %v417 = vmax.f32 %v350, %v415
  %s418 = scalar_lea.vmem [#allocation5], 32
  %v419 = vld [vmem:[%s418] sm:$0xff]
  %v420 = vsel %vm65, %v415, 0
  %422 = vmatpush.msra.mxu0 0.0
  %423 = vmatpush.msra.mxu0 0.0
  %424 = vmatpush.msra.mxu0 0.0
  %425 = vmatpush.msra.mxu0 0.0
  %426 = vmatpush.msra.mxu0 0.0
  %427 = vmatpush.msra.mxu0 0.0
  %428 = vmatpush.msra.mxu0 0.0
  %429 = vmatpush.msra.mxu0 0.0
  %430 = vmatpush.msra.mxu0 0.0
  %431 = vmatpush.msra.mxu0 0.0
  %432 = vmatpush.msra.mxu0 0.0
  %433 = vmatpush.msra.mxu0 0.0
  %434 = vmatpush.msra.mxu0 %v142
  %435 = vmatpush.msra.mxu0 %v141
  %436 = vmatpush.msra.mxu0 %v140
  %437 = vmatpush.msra.mxu0 %v139
  %438 = vmatmul.f32.gmra.mxu0 %v420
  %v439 = vpop.f32.mrf.mxu0
  %v440 = vadd.f32 0.0, %v439
  %441 = vdwg.mxu0
  %v442 = vadd.f32 %v419, %v440
  %v443 = vxor.u32 %v442, 2147483648
  %v444 = vmul.f32 %v443, 1.442695
  %v445 = vpow.pop %v444
  %v446 = vadd.f32 %v445, 1.0
  %v447 = vrcp.pop %v446
  %v448 = vmul.f32 %v446, %v447
  %v449 = vsub.f32 1.0, %v448
  %v450 = vmul.f32 %v447, %v449
  %v451 = vadd.f32 %v447, %v450
  %vm452 = vweird.f32 %v446
  %vm453 = vweird.f32 %v447
  %vm454 = vmor %vm452, %vm453
  %v455 = vsel %vm454, %v447, %v451
  %v456 = vand.u32 2147483647, %v446
  %vm457 = vcmp.eq.f32.partialorder %v456, 8.507059e+37
  %v458 = vand.u32 %v446, 2147483648
  %v459 = vor.u32 1.1754944e-38, %v458
  %v460 = vsel %vm457, %v459, %v455
  %v461 = vmul.f32 1.0, %v460
  %v462 = vtanh.pop %v442
  %v463 = vmul.f32 %v461, %v406
  %465 = vrot.lane.b32.xlu0 %v462, 64
  %v466 = vpop.permute.xlu0 %465
  %v468 = vmul.f32 %v461, %v466
  %470 = vrot.lane.b32.xlu0 %v468, 32
  %v471 = vpop.permute.xlu0 %470
  %v473 = vadd.f32 %v463, %v471
  %v474 = vtanh.pop %v473
  %476 = vrot.lane.b32.xlu0 %v474, 64
  %v477 = vpop.permute.xlu0 %476
  %v479 = vmul.f32 %v461, %v477
  %481 = vrot.lane.b32.xlu0 %v479, 32
  %v482 = vpop.permute.xlu0 %481
  %v484 = vmax.f32 %v417, %v482
  %s485 = scalar_lea.vmem [#allocation5], 40
  %v486 = vld [vmem:[%s485] sm:$0xff]
  %v487 = vsel %vm65, %v482, 0
  %489 = vmatpush.msra.mxu0 0.0
  %490 = vmatpush.msra.mxu0 0.0
  %491 = vmatpush.msra.mxu0 0.0
  %492 = vmatpush.msra.mxu0 0.0
  %493 = vmatpush.msra.mxu0 0.0
  %494 = vmatpush.msra.mxu0 0.0
  %495 = vmatpush.msra.mxu0 0.0
  %496 = vmatpush.msra.mxu0 0.0
  %497 = vmatpush.msra.mxu0 0.0
  %498 = vmatpush.msra.mxu0 0.0
  %499 = vmatpush.msra.mxu0 0.0
  %500 = vmatpush.msra.mxu0 0.0
  %501 = vmatpush.msra.mxu0 %v142
  %502 = vmatpush.msra.mxu0 %v141
  %503 = vmatpush.msra.mxu0 %v140
  %504 = vmatpush.msra.mxu0 %v139
  %505 = vmatmul.f32.gmra.mxu0 %v487
  %v506 = vpop.f32.mrf.mxu0
  %v507 = vadd.f32 0.0, %v506
  %508 = vdwg.mxu0
  %v509 = vadd.f32 %v486, %v507
  %v510 = vxor.u32 %v509, 2147483648
  %v511 = vmul.f32 %v510, 1.442695
  %v512 = vpow.pop %v511
  %v513 = vadd.f32 %v512, 1.0
  %v514 = vrcp.pop %v513
  %v515 = vmul.f32 %v513, %v514
  %v516 = vsub.f32 1.0, %v515
  %v517 = vmul.f32 %v514, %v516
  %v518 = vadd.f32 %v514, %v517
  %vm519 = vweird.f32 %v513
  %vm520 = vweird.f32 %v514
  %vm521 = vmor %vm519, %vm520
  %v522 = vsel %vm521, %v514, %v518
  %v523 = vand.u32 2147483647, %v513
  %vm524 = vcmp.eq.f32.partialorder %v523, 8.507059e+37
  %v525 = vand.u32 %v513, 2147483648
  %v526 = vor.u32 1.1754944e-38, %v525
  %v527 = vsel %vm524, %v526, %v522
  %v528 = vmul.f32 1.0, %v527
  %v529 = vtanh.pop %v509
  %v530 = vmul.f32 %v528, %v473
  %532 = vrot.lane.b32.xlu0 %v529, 64
  %v533 = vpop.permute.xlu0 %532
  %v535 = vmul.f32 %v528, %v533
  %537 = vrot.lane.b32.xlu0 %v535, 32
  %v538 = vpop.permute.xlu0 %537
  %v540 = vadd.f32 %v530, %v538
  %v541 = vtanh.pop %v540
  %543 = vrot.lane.b32.xlu0 %v541, 64
  %v544 = vpop.permute.xlu0 %543
  %v546 = vmul.f32 %v528, %v544
  %548 = vrot.lane.b32.xlu0 %v546, 32
  %v549 = vpop.permute.xlu0 %548
  %v551 = vmax.f32 %v484, %v549
  %s552 = scalar_lea.vmem [#allocation5], 48
  %v553 = vld [vmem:[%s552] sm:$0xff]
  %v554 = vsel %vm65, %v549, 0
  %556 = vmatpush.msra.mxu0 0.0
  %557 = vmatpush.msra.mxu0 0.0
  %558 = vmatpush.msra.mxu0 0.0
  %559 = vmatpush.msra.mxu0 0.0
  %560 = vmatpush.msra.mxu0 0.0
  %561 = vmatpush.msra.mxu0 0.0
  %562 = vmatpush.msra.mxu0 0.0
  %563 = vmatpush.msra.mxu0 0.0
  %564 = vmatpush.msra.mxu0 0.0
  %565 = vmatpush.msra.mxu0 0.0
  %566 = vmatpush.msra.mxu0 0.0
  %567 = vmatpush.msra.mxu0 0.0
  %568 = vmatpush.msra.mxu0 %v142
  %569 = vmatpush.msra.mxu0 %v141
  %570 = vmatpush.msra.mxu0 %v140
  %571 = vmatpush.msra.mxu0 %v139
  %572 = vmatmul.f32.gmra.mxu0 %v554
  %v573 = vpop.f32.mrf.mxu0
  %v574 = vadd.f32 0.0, %v573
  %575 = vdwg.mxu0
  %v576 = vadd.f32 %v553, %v574
  %v577 = vxor.u32 %v576, 2147483648
  %v578 = vmul.f32 %v577, 1.442695
  %v579 = vpow.pop %v578
  %v580 = vadd.f32 %v579, 1.0
  %v581 = vrcp.pop %v580
  %v582 = vmul.f32 %v580, %v581
  %v583 = vsub.f32 1.0, %v582
  %v584 = vmul.f32 %v581, %v583
  %v585 = vadd.f32 %v581, %v584
  %vm586 = vweird.f32 %v580
  %vm587 = vweird.f32 %v581
  %vm588 = vmor %vm586, %vm587
  %v589 = vsel %vm588, %v581, %v585
  %v590 = vand.u32 2147483647, %v580
  %vm591 = vcmp.eq.f32.partialorder %v590, 8.507059e+37
  %v592 = vand.u32 %v580, 2147483648
  %v593 = vor.u32 1.1754944e-38, %v592
  %v594 = vsel %vm591, %v593, %v589
  %v595 = vmul.f32 1.0, %v594
  %v596 = vtanh.pop %v576
  %v597 = vmul.f32 %v595, %v540
  %599 = vrot.lane.b32.xlu0 %v596, 64
  %v600 = vpop.permute.xlu0 %599
  %v602 = vmul.f32 %v595, %v600
  %604 = vrot.lane.b32.xlu0 %v602, 32
  %v605 = vpop.permute.xlu0 %604
  %v607 = vadd.f32 %v597, %v605
  %v608 = vtanh.pop %v607
  %610 = vrot.lane.b32.xlu0 %v608, 64
  %v611 = vpop.permute.xlu0 %610
  %v613 = vmul.f32 %v595, %v611
  %615 = vrot.lane.b32.xlu0 %v613, 32
  %v616 = vpop.permute.xlu0 %615
  %v618 = vmax.f32 %v551, %v616
  %s619 = scalar_lea.vmem [#allocation5], 56
  %v620 = vld [vmem:[%s619] sm:$0xff]
  %v621 = vsel %vm65, %v616, 0
  %623 = vmatpush.msra.mxu0 0.0
  %624 = vmatpush.msra.mxu0 0.0
  %625 = vmatpush.msra.mxu0 0.0
  %626 = vmatpush.msra.mxu0 0.0
  %627 = vmatpush.msra.mxu0 0.0
  %628 = vmatpush.msra.mxu0 0.0
  %629 = vmatpush.msra.mxu0 0.0
  %630 = vmatpush.msra.mxu0 0.0
  %631 = vmatpush.msra.mxu0 0.0
  %632 = vmatpush.msra.mxu0 0.0
  %633 = vmatpush.msra.mxu0 0.0
  %634 = vmatpush.msra.mxu0 0.0
  %635 = vmatpush.msra.mxu0 %v142
  %636 = vmatpush.msra.mxu0 %v141
  %637 = vmatpush.msra.mxu0 %v140
  %638 = vmatpush.msra.mxu0 %v139
  %639 = vmatmul.f32.gmra.mxu0 %v621
  %v640 = vpop.f32.mrf.mxu0
  %v641 = vadd.f32 0.0, %v640
  %642 = vdwg.mxu0
  %v643 = vadd.f32 %v620, %v641
  %v644 = vxor.u32 %v643, 2147483648
  %v645 = vmul.f32 %v644, 1.442695
  %v646 = vpow.pop %v645
  %v647 = vadd.f32 %v646, 1.0
  %v648 = vrcp.pop %v647
  %v649 = vmul.f32 %v647, %v648
  %v650 = vsub.f32 1.0, %v649
  %v651 = vmul.f32 %v648, %v650
  %v652 = vadd.f32 %v648, %v651
  %vm653 = vweird.f32 %v647
  %vm654 = vweird.f32 %v648
  %vm655 = vmor %vm653, %vm654
  %v656 = vsel %vm655, %v648, %v652
  %v657 = vand.u32 2147483647, %v647
  %vm658 = vcmp.eq.f32.partialorder %v657, 8.507059e+37
  %v659 = vand.u32 %v647, 2147483648
  %v660 = vor.u32 1.1754944e-38, %v659
  %v661 = vsel %vm658, %v660, %v656
  %v662 = vmul.f32 1.0, %v661
  %v663 = vtanh.pop %v643
  %v664 = vmul.f32 %v662, %v607
  %666 = vrot.lane.b32.xlu0 %v663, 64
  %v667 = vpop.permute.xlu0 %666
  %v669 = vmul.f32 %v662, %v667
  %671 = vrot.lane.b32.xlu0 %v669, 32
  %v672 = vpop.permute.xlu0 %671
  %v674 = vadd.f32 %v664, %v672
  %v675 = vtanh.pop %v674
  %677 = vrot.lane.b32.xlu0 %v675, 64
  %v678 = vpop.permute.xlu0 %677
  %v680 = vmul.f32 %v662, %v678
  %682 = vrot.lane.b32.xlu0 %v680, 32
  %v683 = vpop.permute.xlu0 %682
  %v685 = vmax.f32 %v618, %v683
  %686 = vst.msk [vmem:[#allocation2] sm:$0xff] %vm65, %v683
  %688 = vrot.lane.b32.xlu0 %v674, 96
  %v689 = vpop.permute.xlu0 %688
  %691 = vst.msk [vmem:[#allocation3] sm:$0xff] %vm65, %v689
  %692 = vst.msk [vmem:[#allocation4] sm:$0xff] %vm65, %v685
  // Predicated region
  $region54: #{full_word_lm_forward.1} parent=0 // pred_check
    %p693 = pneg %p41
  $region55: #{full_word_lm_forward.1} parent=0 // pred_check_branch
    %695 = sbr.rel (%p693) target = $region57
  $region56: #{full_word_lm_forward.1} parent=0 // pred_region
    %v696 = vld [vmem:[#allocation4] sm:$0xff]
    %v697 = vtanh.pop %v696
    %v698 = vld [vmem:[%s5] sm:$0xff]
    %v699 = vld [vmem:[%s5 + $0x8] sm:$0xff]
    %v700 = vld [vmem:[%s5 + $0x10] sm:$0xff]
    %v701 = vld [vmem:[%s5 + $0x18] sm:$0xff]
    %v702 = vld [vmem:[%s6] sm:$0x1]
    %v704 = vperm.slane %v702, 0
    %v707 = vsel %vm65, %v697, 0
    %709 = vmatpush.msra.mxu0 0.0
    %710 = vmatpush.msra.mxu0 0.0
    %711 = vmatpush.msra.mxu0 0.0
    %712 = vmatpush.msra.mxu0 0.0
    %713 = vmatpush.msra.mxu0 0.0
    %714 = vmatpush.msra.mxu0 0.0
    %715 = vmatpush.msra.mxu0 0.0
    %716 = vmatpush.msra.mxu0 0.0
    %717 = vmatpush.msra.mxu0 0.0
    %718 = vmatpush.msra.mxu0 0.0
    %719 = vmatpush.msra.mxu0 0.0
    %720 = vmatpush.msra.mxu0 0.0
    %721 = vmatpush.msra.mxu0 %v701
    %722 = vmatpush.msra.mxu0 %v700
    %723 = vmatpush.msra.mxu0 %v699
    %724 = vmatpush.msra.mxu0 %v698
    %725 = vmatmul.f32.gmra.mxu0 %v707
    %v726 = vpop.f32.mrf.mxu0
    %v727 = vadd.f32 %v704, %v726
    %728 = vdwg.mxu0
    %v729 = vld [vmem:[%s4] sm:$0xff]
    %v730 = vld [vmem:[%s7] sm:$0x3]
    %v731 = vld [vmem:[%s8] sm:$0x1]
    %v733 = vperm.slane %v731, 0
    %vm735 = vcmask 15360
    %v737 = vsel %vm735, %v729, 0
    %vm739 = vcmask 1041408
    %v741 = vsel %vm739, %v730, 0
    %743 = vmatpush.msra.mxu0 0.0
    %744 = vmatpush.msra.mxu0 0.0
    %745 = vmatpush.msra.mxu0 0.0
    %746 = vmatpush.msra.mxu0 0.0
    %747 = vmatpush.msra.mxu0 0.0
    %748 = vmatpush.msra.mxu0 0.0
    %749 = vmatpush.msra.mxu0 0.0
    %750 = vmatpush.msra.mxu0 0.0
    %751 = vmatpush.msra.mxu0 0.0
    %752 = vmatpush.msra.mxu0 0.0
    %753 = vmatpush.msra.mxu0 0.0
    %754 = vmatpush.msra.mxu0 0.0
    %755 = vmatpush.msra.mxu0 0.0
    %756 = vmatpush.msra.mxu0 0.0
    %757 = vmatpush.msra.mxu0 0.0
    %758 = vmatpush.msra.mxu0 %v741
    %759 = vmatmul.f32.gmra.mxu0 %v737
    %v760 = vpop.f32.mrf.mxu0
    %v761 = vadd.f32 %v733, %v760
    %762 = vdwg.mxu0
    %v763 = vtanh.pop %v761
    %v764 = vtanh.pop %v727
    %v765 = vld [vmem:[%s9] sm:$0xff]
    %v766 = vld [vmem:[%s9 + $0x8] sm:$0xff]
    %v767 = vld [vmem:[%s9 + $0x10] sm:$0xff]
    %v768 = vld [vmem:[%s9 + $0x18] sm:$0xff]
    %v769 = vtanh.pop %v763
    %v770 = vld [vmem:[%s10] sm:$0xff]
    %v771 = vld [vmem:[%s10 + $0x8] sm:$0xff]
    %v772 = vld [vmem:[%s10 + $0x10] sm:$0xff]
    %v773 = vld [vmem:[%s10 + $0x18] sm:$0xff]
    %v775 = vsel %vm65, %v769, 0
    %777 = vmatpush.msra.mxu0 0.0
    %778 = vmatpush.msra.mxu0 0.0
    %779 = vmatpush.msra.mxu0 0.0
    %780 = vmatpush.msra.mxu0 0.0
    %781 = vmatpush.msra.mxu0 0.0
    %782 = vmatpush.msra.mxu0 0.0
    %783 = vmatpush.msra.mxu0 0.0
    %784 = vmatpush.msra.mxu0 0.0
    %785 = vmatpush.msra.mxu0 0.0
    %786 = vmatpush.msra.mxu0 0.0
    %787 = vmatpush.msra.mxu0 0.0
    %788 = vmatpush.msra.mxu0 0.0
    %789 = vmatpush.msra.mxu0 %v773
    %790 = vmatpush.msra.mxu0 %v772
    %791 = vmatpush.msra.mxu0 %v771
    %792 = vmatpush.msra.mxu0 %v770
    %793 = vmatmul.f32.gmra.mxu0 %v775
    %v794 = vpop.f32.mrf.mxu0
    %v795 = vadd.f32 0.0, %v794
    %796 = vdwg.mxu0
    %v798 = vsel %vm65, %v764, 0
    %800 = vmatpush.msra.mxu0 0.0
    %801 = vmatpush.msra.mxu0 0.0
    %802 = vmatpush.msra.mxu0 0.0
    %803 = vmatpush.msra.mxu0 0.0
    %804 = vmatpush.msra.mxu0 0.0
    %805 = vmatpush.msra.mxu0 0.0
    %806 = vmatpush.msra.mxu0 0.0
    %807 = vmatpush.msra.mxu0 0.0
    %808 = vmatpush.msra.mxu0 0.0
    %809 = vmatpush.msra.mxu0 0.0
    %810 = vmatpush.msra.mxu0 0.0
    %811 = vmatpush.msra.mxu0 0.0
    %812 = vmatpush.msra.mxu0 %v768
    %813 = vmatpush.msra.mxu0 %v767
    %814 = vmatpush.msra.mxu0 %v766
    %815 = vmatpush.msra.mxu0 %v765
    %816 = vmatmul.f32.gmra.mxu0 %v798
    %v817 = vpop.f32.mrf.mxu0
    %v818 = vadd.f32 %v795, %v817
    %819 = vdwg.mxu0
    %v820 = vld [vmem:[%s11] sm:$0x1]
    %v822 = vperm.slane %v820, 0
    %v824 = vadd.f32 %v818, %v822
    %825 = vst [vmem:[%s12] sm:$0xff] %v824
  $region57: #{full_word_lm_forward.1} parent=0 // pred_fallthru
    _
  // Predicated region
  $region58: #{full_word_lm_forward.1} parent=0 // pred_check
    _
  $region59: #{full_word_lm_forward.1} parent=0 // pred_check_branch
    %827 = sbr.rel (0) target = $region61
  $region60: #{full_word_lm_forward.1} parent=0 // pred_region
    _
  $region61: #{full_word_lm_forward.1} parent=0 // pred_fallthru
    _
  // Predicated region
  $region62: #{full_word_lm_forward.1} parent=0 // pred_check
    _
  $region63: #{full_word_lm_forward.1} parent=0 // pred_check_branch
    %829 = sbr.rel (0) target = $region65
  $region64: #{full_word_lm_forward.1} parent=0 // pred_region
    _
  $region65: #{full_word_lm_forward.1} parent=0 // pred_fallthru
    _

</llo_original>
